<compile_context>
chip_gen: v7x
topology: tpu7x:2x2x1
jax: 0.10.0
libtpu: 0.0.40
codegen_flags: <defaults>
</compile_context>

<pallas_src>
import jax
import jax.numpy as jnp
from jax.experimental import pallas as pl
from jax.experimental.pallas import tpu as pltpu

H_SIZE = 32
NUM_CLASSES = 4
LANE = 128
SUBLANE = 8


def _rup(n, m):
    return ((n + m - 1) // m) * m


def _pad2(a, rows, cols):
    out = jnp.zeros((rows, cols), a.dtype)
    return out.at[: a.shape[0], : a.shape[1]].set(a)


# ----------------------------- fused Pallas kernel -----------------------------

def make_fused_kernel(node_order, edge_types, labeled_node_type, n_labeled):
    """Build the single fused forward kernel (static relation structure)."""
    nt_idx = {nt: i for i, nt in enumerate(node_order)}
    n_rel = len(edge_types)
    n_nt = len(node_order)

    def kernel(*refs):
        # ---- unpack the flat operand list (all VMEM-resident) ----
        adj = refs[0:n_rel]                                   # per relation: A[dst,src] bf16
        xs = refs[n_rel:n_rel + n_nt]                         # per node type: X bf16 (padded)
        base = n_rel + n_nt
        w1 = refs[base:base + 3 * n_rel]                      # (Wrel^T, b_rel, Wroot^T) x rel
        w2 = refs[base + 3 * n_rel:base + 6 * n_rel]
        labels_ref = refs[base + 6 * n_rel]                   # (N_pad, 1) int32, -1 = pad
        loss_ref = refs[base + 6 * n_rel + 1]                 # (1, 1) f32 output

        def graphconv(a, xsrc, xdst, wrel_t, brel, wroot_t):
            # A @ (X_src @ Wrel^T): contract features before the dense aggregation.
            msg = jnp.dot(xsrc, wrel_t, preferred_element_type=jnp.float32)
            agg = jnp.dot(a, msg.astype(jnp.bfloat16),
                          preferred_element_type=jnp.float32)
            root = jnp.dot(xdst, wroot_t, preferred_element_type=jnp.float32)
            return agg + brel + root                          # f32

        # ---- layer 1: HeteroConv(GraphConv(in -> H)), aggr='sum' over relations
        h = [None] * n_nt
        for r, (src, _, dst) in enumerate(edge_types):
            o = graphconv(adj[r][...], xs[nt_idx[src]][...], xs[nt_idx[dst]][...],
                          w1[3 * r][...], w1[3 * r + 1][...], w1[3 * r + 2][...])
            d = nt_idx[dst]
            h[d] = o if h[d] is None else h[d] + o

        # ---- inter-layer ReLU (fused in-kernel, no XLA glue op)
        h = [None if v is None else jnp.maximum(v, 0.0) for v in h]

        # ---- layer 2: HeteroConv(GraphConv(H -> C)), aggr='sum'
        o_acc = [None] * n_nt
        for r, (src, _, dst) in enumerate(edge_types):
            hs, hd = h[nt_idx[src]], h[nt_idx[dst]]
            if hs is None or hd is None:
                continue  # HeteroConv skips relations whose endpoints received no features
            o = graphconv(adj[r][...], hs.astype(jnp.bfloat16),
                          hd.astype(jnp.bfloat16),
                          w2[3 * r][...], w2[3 * r + 1][...], w2[3 * r + 2][...])
            d = nt_idx[dst]
            o_acc[d] = o if o_acc[d] is None else o_acc[d] + o

        # ---- mean cross-entropy over the labeled node type (padded rows masked)
        logits = o_acc[nt_idx[labeled_node_type]]             # (N_pad, C) f32
        labels = labels_ref[...]                              # (N_pad, 1) int32
        m = jnp.max(logits, axis=-1, keepdims=True)
        lse = jnp.log(jnp.sum(jnp.exp(logits - m), axis=-1, keepdims=True)) + m
        cls = jax.lax.broadcasted_iota(jnp.int32, logits.shape, 1)
        picked = jnp.sum(jnp.where(cls == labels, logits, 0.0),
                         axis=-1, keepdims=True)
        valid = (labels >= 0).astype(jnp.float32)
        total = jnp.sum((lse - picked) * valid, axis=0, keepdims=True)   # (1, 1)
        loss_ref[...] = total / float(n_labeled)

    return kernel


def build_fused_forward(node_order, edge_types, labeled_node_type, n_labeled):
    kernel = make_fused_kernel(node_order, edge_types, labeled_node_type, n_labeled)
    n_inputs = len(edge_types) + len(node_order) + 6 * len(edge_types) + 1
    vmem = pl.BlockSpec(memory_space=pltpu.MemorySpace.VMEM)
    # TODO(synk): for realistic node counts (FakeHeteroDataset avg 20k nodes) the
    # dense adjacency no longer fits VMEM (notably v7x's 64 MiB); the scaling path
    # is a grid over the contraction axis with a VMEM accumulator, or a
    # scalar-prefetch sparse gather/segment-sum kernel over edge_index.
    return pl.pallas_call(
        kernel,
        out_shape=jax.ShapeDtypeStruct((1, 1), jnp.float32),
        in_specs=[vmem] * n_inputs,
        out_specs=vmem,
    )


def forward(fused_call, operands):
    """Mirrors TestModule.forward: returns [cross_entropy_loss]."""
    return [fused_call(*operands)[0, 0]]


# --------------------------------- driver ----------------------------------

if __name__ == "__main__":
    key = jax.random.PRNGKey(0)

    # Small synthetic heterogeneous graph (stand-in for FakeHeteroDataset).
    node_types = {"v0": (16, 8), "v1": (12, 12)}   # type -> (num_nodes, in_feat)
    node_order = list(node_types.keys())
    edge_types = [("v0", "e0", "v0"), ("v0", "e1", "v1"), ("v1", "e2", "v0")]
    labeled_node_type = "v0"
    num_edges = 48

    keys = iter(jax.random.split(key, 32))

    # --- padded geometry: node counts -> sublane multiples, features -> lane width
    n_pad = {nt: _rup(n, SUBLANE) for nt, (n, f) in node_types.items()}
    f_pad = {nt: _rup(f, LANE) for nt, (n, f) in node_types.items()}

    # --- node features (zero-padded, bf16 for the MXU)
    x_pad = {}
    for nt, (n, f) in node_types.items():
        x = jax.random.normal(next(keys), (n, f), jnp.float32)
        x_pad[nt] = _pad2(x, n_pad[nt], f_pad[nt]).astype(jnp.bfloat16)

    # --- densify each relation's edge_index into A[dst, src] edge-count matrix.
    # TODO(synk): true sparse scatter-add aggregation (edge_index gather) is done
    # as a dense-adjacency matmul; a PrefetchScalarGridSpec gather kernel would
    # scale with E instead of N^2.
    adj_pad = {}
    for (src, rel, dst) in edge_types:
        n_src, n_dst = node_types[src][0], node_types[dst][0]
        src_idx = jax.random.randint(next(keys), (num_edges,), 0, n_src)
        dst_idx = jax.random.randint(next(keys), (num_edges,), 0, n_dst)
        a = jnp.zeros((n_dst, n_src), jnp.float32).at[dst_idx, src_idx].add(1.0)
        # edge counts are exact in bf16 up to 256
        adj_pad[(src, rel, dst)] = _pad2(a, n_pad[dst], n_pad[src]).astype(jnp.bfloat16)

    # --- labels for the labeled node type, padded with -1 (masked in-kernel)
    n_lab = node_types[labeled_node_type][0]
    n_lab_pad = n_pad[labeled_node_type]
    y = jax.random.randint(next(keys), (n_lab,), 0, NUM_CLASSES)
    y_pad = jnp.full((n_lab_pad, 1), -1, jnp.int32).at[:n_lab, 0].set(y.astype(jnp.int32))

    # --- GraphConv params: pre-transposed, zero-padded, bf16 (layout done once,
    #     no per-call .T / .reshape glue ops)
    def init_graphconv(k, in_src, in_dst, out, in_src_pad, in_dst_pad):
        k1, k2, k3 = jax.random.split(k, 3)
        b_rel = 1.0 / jnp.sqrt(float(in_src))
        b_root = 1.0 / jnp.sqrt(float(in_dst))
        w_rel = jax.random.uniform(k1, (out, in_src), jnp.float32, -b_rel, b_rel)
        bias = jax.random.uniform(k2, (out,), jnp.float32, -b_rel, b_rel)
        w_root = jax.random.uniform(k3, (out, in_dst), jnp.float32, -b_root, b_root)
        return (
            _pad2(w_rel.T, in_src_pad, out).astype(jnp.bfloat16),    # Wrel^T
            bias.reshape(1, out).astype(jnp.float32),                # b_rel (f32)
            _pad2(w_root.T, in_dst_pad, out).astype(jnp.bfloat16),   # Wroot^T
        )

    conv1, conv2 = {}, {}
    for et in edge_types:
        src, _, dst = et
        conv1[et] = init_graphconv(next(keys), node_types[src][1], node_types[dst][1],
                                   H_SIZE, f_pad[src], f_pad[dst])
        conv2[et] = init_graphconv(next(keys), H_SIZE, H_SIZE, NUM_CLASSES,
                                   H_SIZE, H_SIZE)

    # --- assemble the flat operand list for the single fused pallas_call
    operands = ([adj_pad[et] for et in edge_types]
                + [x_pad[nt] for nt in node_order]
                + [t for et in edge_types for t in conv1[et]]
                + [t for et in edge_types for t in conv2[et]]
                + [y_pad])

    fused = build_fused_forward(node_order, edge_types, labeled_node_type, n_lab)
    out = forward(fused, operands)
    loss = jax.block_until_ready(out[0])
    assert jnp.isfinite(loss)
    print("KERNEL_OK")
</pallas_src>

<mosaic_0001>
module attributes {stable_mosaic.version = 11 : i64} {
  func.func @kernel(%arg0: memref<16x16xbf16, #tpu.memory_space<vmem>>, %arg1: memref<16x16xbf16, #tpu.memory_space<vmem>>, %arg2: memref<16x16xbf16, #tpu.memory_space<vmem>>, %arg3: memref<16x128xbf16, #tpu.memory_space<vmem>>, %arg4: memref<16x128xbf16, #tpu.memory_space<vmem>>, %arg5: memref<128x32xbf16, #tpu.memory_space<vmem>>, %arg6: memref<1x32xf32, #tpu.memory_space<vmem>>, %arg7: memref<128x32xbf16, #tpu.memory_space<vmem>>, %arg8: memref<128x32xbf16, #tpu.memory_space<vmem>>, %arg9: memref<1x32xf32, #tpu.memory_space<vmem>>, %arg10: memref<128x32xbf16, #tpu.memory_space<vmem>>, %arg11: memref<128x32xbf16, #tpu.memory_space<vmem>>, %arg12: memref<1x32xf32, #tpu.memory_space<vmem>>, %arg13: memref<128x32xbf16, #tpu.memory_space<vmem>>, %arg14: memref<32x4xbf16, #tpu.memory_space<vmem>>, %arg15: memref<1x4xf32, #tpu.memory_space<vmem>>, %arg16: memref<32x4xbf16, #tpu.memory_space<vmem>>, %arg17: memref<32x4xbf16, #tpu.memory_space<vmem>>, %arg18: memref<1x4xf32, #tpu.memory_space<vmem>>, %arg19: memref<32x4xbf16, #tpu.memory_space<vmem>>, %arg20: memref<32x4xbf16, #tpu.memory_space<vmem>>, %arg21: memref<1x4xf32, #tpu.memory_space<vmem>>, %arg22: memref<32x4xbf16, #tpu.memory_space<vmem>>, %arg23: memref<16x1xi32, #tpu.memory_space<vmem>>, %arg24: memref<1x1xf32, #tpu.memory_space<vmem>>) attributes {dimension_semantics = [], scalar_prefetch = 0 : i64, scratch_operands = 0 : i64, tpu.core_type = #tpu.core_type<tc>} {
    %c0 = arith.constant 0 : index
    %c0_0 = arith.constant 0 : index
    %0 = vector.load %arg0[%c0, %c0_0] : memref<16x16xbf16, #tpu.memory_space<vmem>>, vector<16x16xbf16>
    %c0_1 = arith.constant 0 : index
    %c0_2 = arith.constant 0 : index
    %1 = vector.load %arg3[%c0_1, %c0_2] : memref<16x128xbf16, #tpu.memory_space<vmem>>, vector<16x128xbf16>
    %c0_3 = arith.constant 0 : index
    %c0_4 = arith.constant 0 : index
    %2 = vector.load %arg3[%c0_3, %c0_4] : memref<16x128xbf16, #tpu.memory_space<vmem>>, vector<16x128xbf16>
    %c0_5 = arith.constant 0 : index
    %c0_6 = arith.constant 0 : index
    %3 = vector.load %arg5[%c0_5, %c0_6] : memref<128x32xbf16, #tpu.memory_space<vmem>>, vector<128x32xbf16>
    %c0_7 = arith.constant 0 : index
    %c0_8 = arith.constant 0 : index
    %4 = vector.load %arg6[%c0_7, %c0_8] : memref<1x32xf32, #tpu.memory_space<vmem>>, vector<1x32xf32>
    %c0_9 = arith.constant 0 : index
    %c0_10 = arith.constant 0 : index
    %5 = vector.load %arg7[%c0_9, %c0_10] : memref<128x32xbf16, #tpu.memory_space<vmem>>, vector<128x32xbf16>
    %cst = arith.constant dense<0.000000e+00> : vector<16x32xf32>
    %6 = tpu.matmul %1, %3, %cst {dimension_numbers = #tpu.dot_dimension_numbers<[1], [0], [0], [1], [0, 0, 1, 1], [], []>} : vector<16x128xbf16>, vector<128x32xbf16>, vector<16x32xf32> -> vector<16x32xf32>
    %7 = arith.truncf %6 : vector<16x32xf32> to vector<16x32xbf16>
    %cst_11 = arith.constant dense<0.000000e+00> : vector<16x32xf32>
    %8 = tpu.matmul %0, %7, %cst_11 {dimension_numbers = #tpu.dot_dimension_numbers<[1], [0], [0], [1], [0, 0, 1, 1], [], []>} : vector<16x16xbf16>, vector<16x32xbf16>, vector<16x32xf32> -> vector<16x32xf32>
    %cst_12 = arith.constant dense<0.000000e+00> : vector<16x32xf32>
    %9 = tpu.matmul %2, %5, %cst_12 {dimension_numbers = #tpu.dot_dimension_numbers<[1], [0], [0], [1], [0, 0, 1, 1], [], []>} : vector<16x128xbf16>, vector<128x32xbf16>, vector<16x32xf32> -> vector<16x32xf32>
    %10 = vector.broadcast %4 : vector<1x32xf32> to vector<16x32xf32>
    %11 = arith.addf %8, %10 : vector<16x32xf32>
    %12 = arith.addf %11, %9 : vector<16x32xf32>
    %c0_13 = arith.constant 0 : index
    %c0_14 = arith.constant 0 : index
    %13 = vector.load %arg1[%c0_13, %c0_14] : memref<16x16xbf16, #tpu.memory_space<vmem>>, vector<16x16xbf16>
    %c0_15 = arith.constant 0 : index
    %c0_16 = arith.constant 0 : index
    %14 = vector.load %arg3[%c0_15, %c0_16] : memref<16x128xbf16, #tpu.memory_space<vmem>>, vector<16x128xbf16>
    %c0_17 = arith.constant 0 : index
    %c0_18 = arith.constant 0 : index
    %15 = vector.load %arg4[%c0_17, %c0_18] : memref<16x128xbf16, #tpu.memory_space<vmem>>, vector<16x128xbf16>
    %c0_19 = arith.constant 0 : index
    %c0_20 = arith.constant 0 : index
    %16 = vector.load %arg8[%c0_19, %c0_20] : memref<128x32xbf16, #tpu.memory_space<vmem>>, vector<128x32xbf16>
    %c0_21 = arith.constant 0 : index
    %c0_22 = arith.constant 0 : index
    %17 = vector.load %arg9[%c0_21, %c0_22] : memref<1x32xf32, #tpu.memory_space<vmem>>, vector<1x32xf32>
    %c0_23 = arith.constant 0 : index
    %c0_24 = arith.constant 0 : index
    %18 = vector.load %arg10[%c0_23, %c0_24] : memref<128x32xbf16, #tpu.memory_space<vmem>>, vector<128x32xbf16>
    %cst_25 = arith.constant dense<0.000000e+00> : vector<16x32xf32>
    %19 = tpu.matmul %14, %16, %cst_25 {dimension_numbers = #tpu.dot_dimension_numbers<[1], [0], [0], [1], [0, 0, 1, 1], [], []>} : vector<16x128xbf16>, vector<128x32xbf16>, vector<16x32xf32> -> vector<16x32xf32>
    %20 = arith.truncf %19 : vector<16x32xf32> to vector<16x32xbf16>
    %cst_26 = arith.constant dense<0.000000e+00> : vector<16x32xf32>
    %21 = tpu.matmul %13, %20, %cst_26 {dimension_numbers = #tpu.dot_dimension_numbers<[1], [0], [0], [1], [0, 0, 1, 1], [], []>} : vector<16x16xbf16>, vector<16x32xbf16>, vector<16x32xf32> -> vector<16x32xf32>
    %cst_27 = arith.constant dense<0.000000e+00> : vector<16x32xf32>
    %22 = tpu.matmul %15, %18, %cst_27 {dimension_numbers = #tpu.dot_dimension_numbers<[1], [0], [0], [1], [0, 0, 1, 1], [], []>} : vector<16x128xbf16>, vector<128x32xbf16>, vector<16x32xf32> -> vector<16x32xf32>
    %23 = vector.broadcast %17 : vector<1x32xf32> to vector<16x32xf32>
    %24 = arith.addf %21, %23 : vector<16x32xf32>
    %25 = arith.addf %24, %22 : vector<16x32xf32>
    %c0_28 = arith.constant 0 : index
    %c0_29 = arith.constant 0 : index
    %26 = vector.load %arg2[%c0_28, %c0_29] : memref<16x16xbf16, #tpu.memory_space<vmem>>, vector<16x16xbf16>
    %c0_30 = arith.constant 0 : index
    %c0_31 = arith.constant 0 : index
    %27 = vector.load %arg4[%c0_30, %c0_31] : memref<16x128xbf16, #tpu.memory_space<vmem>>, vector<16x128xbf16>
    %c0_32 = arith.constant 0 : index
    %c0_33 = arith.constant 0 : index
    %28 = vector.load %arg3[%c0_32, %c0_33] : memref<16x128xbf16, #tpu.memory_space<vmem>>, vector<16x128xbf16>
    %c0_34 = arith.constant 0 : index
    %c0_35 = arith.constant 0 : index
    %29 = vector.load %arg11[%c0_34, %c0_35] : memref<128x32xbf16, #tpu.memory_space<vmem>>, vector<128x32xbf16>
    %c0_36 = arith.constant 0 : index
    %c0_37 = arith.constant 0 : index
    %30 = vector.load %arg12[%c0_36, %c0_37] : memref<1x32xf32, #tpu.memory_space<vmem>>, vector<1x32xf32>
    %c0_38 = arith.constant 0 : index
    %c0_39 = arith.constant 0 : index
    %31 = vector.load %arg13[%c0_38, %c0_39] : memref<128x32xbf16, #tpu.memory_space<vmem>>, vector<128x32xbf16>
    %cst_40 = arith.constant dense<0.000000e+00> : vector<16x32xf32>
    %32 = tpu.matmul %27, %29, %cst_40 {dimension_numbers = #tpu.dot_dimension_numbers<[1], [0], [0], [1], [0, 0, 1, 1], [], []>} : vector<16x128xbf16>, vector<128x32xbf16>, vector<16x32xf32> -> vector<16x32xf32>
    %33 = arith.truncf %32 : vector<16x32xf32> to vector<16x32xbf16>
    %cst_41 = arith.constant dense<0.000000e+00> : vector<16x32xf32>
    %34 = tpu.matmul %26, %33, %cst_41 {dimension_numbers = #tpu.dot_dimension_numbers<[1], [0], [0], [1], [0, 0, 1, 1], [], []>} : vector<16x16xbf16>, vector<16x32xbf16>, vector<16x32xf32> -> vector<16x32xf32>
    %cst_42 = arith.constant dense<0.000000e+00> : vector<16x32xf32>
    %35 = tpu.matmul %28, %31, %cst_42 {dimension_numbers = #tpu.dot_dimension_numbers<[1], [0], [0], [1], [0, 0, 1, 1], [], []>} : vector<16x128xbf16>, vector<128x32xbf16>, vector<16x32xf32> -> vector<16x32xf32>
    %36 = vector.broadcast %30 : vector<1x32xf32> to vector<16x32xf32>
    %37 = arith.addf %34, %36 : vector<16x32xf32>
    %38 = arith.addf %37, %35 : vector<16x32xf32>
    %39 = arith.addf %12, %38 : vector<16x32xf32>
    %cst_43 = arith.constant 0.000000e+00 : f32
    %40 = vector.broadcast %cst_43 : f32 to vector<16x32xf32>
    %41 = arith.maximumf %39, %40 : vector<16x32xf32>
    %cst_44 = arith.constant 0.000000e+00 : f32
    %42 = vector.broadcast %cst_44 : f32 to vector<16x32xf32>
    %43 = arith.maximumf %25, %42 : vector<16x32xf32>
    %c0_45 = arith.constant 0 : index
    %c0_46 = arith.constant 0 : index
    %44 = vector.load %arg0[%c0_45, %c0_46] : memref<16x16xbf16, #tpu.memory_space<vmem>>, vector<16x16xbf16>
    %45 = arith.truncf %41 : vector<16x32xf32> to vector<16x32xbf16>
    %46 = arith.truncf %41 : vector<16x32xf32> to vector<16x32xbf16>
    %c0_47 = arith.constant 0 : index
    %c0_48 = arith.constant 0 : index
    %47 = vector.load %arg14[%c0_47, %c0_48] : memref<32x4xbf16, #tpu.memory_space<vmem>>, vector<32x4xbf16>
    %c0_49 = arith.constant 0 : index
    %c0_50 = arith.constant 0 : index
    %48 = vector.load %arg15[%c0_49, %c0_50] : memref<1x4xf32, #tpu.memory_space<vmem>>, vector<1x4xf32>
    %c0_51 = arith.constant 0 : index
    %c0_52 = arith.constant 0 : index
    %49 = vector.load %arg16[%c0_51, %c0_52] : memref<32x4xbf16, #tpu.memory_space<vmem>>, vector<32x4xbf16>
    %cst_53 = arith.constant dense<0.000000e+00> : vector<16x4xf32>
    %50 = tpu.matmul %45, %47, %cst_53 {dimension_numbers = #tpu.dot_dimension_numbers<[1], [0], [0], [1], [0, 0, 1, 1], [], []>} : vector<16x32xbf16>, vector<32x4xbf16>, vector<16x4xf32> -> vector<16x4xf32>
    %51 = arith.truncf %50 : vector<16x4xf32> to vector<16x4xbf16>
    %cst_54 = arith.constant dense<0.000000e+00> : vector<16x4xf32>
    %52 = tpu.matmul %44, %51, %cst_54 {dimension_numbers = #tpu.dot_dimension_numbers<[1], [0], [0], [1], [0, 0, 1, 1], [], []>} : vector<16x16xbf16>, vector<16x4xbf16>, vector<16x4xf32> -> vector<16x4xf32>
    %cst_55 = arith.constant dense<0.000000e+00> : vector<16x4xf32>
    %53 = tpu.matmul %46, %49, %cst_55 {dimension_numbers = #tpu.dot_dimension_numbers<[1], [0], [0], [1], [0, 0, 1, 1], [], []>} : vector<16x32xbf16>, vector<32x4xbf16>, vector<16x4xf32> -> vector<16x4xf32>
    %54 = vector.broadcast %48 : vector<1x4xf32> to vector<16x4xf32>
    %55 = arith.addf %52, %54 : vector<16x4xf32>
    %56 = arith.addf %55, %53 : vector<16x4xf32>
    %c0_56 = arith.constant 0 : index
    %c0_57 = arith.constant 0 : index
    %57 = vector.load %arg2[%c0_56, %c0_57] : memref<16x16xbf16, #tpu.memory_space<vmem>>, vector<16x16xbf16>
    %58 = arith.truncf %43 : vector<16x32xf32> to vector<16x32xbf16>
    %59 = arith.truncf %41 : vector<16x32xf32> to vector<16x32xbf16>
    %c0_58 = arith.constant 0 : index
    %c0_59 = arith.constant 0 : index
    %60 = vector.load %arg20[%c0_58, %c0_59] : memref<32x4xbf16, #tpu.memory_space<vmem>>, vector<32x4xbf16>
    %c0_60 = arith.constant 0 : index
    %c0_61 = arith.constant 0 : index
    %61 = vector.load %arg21[%c0_60, %c0_61] : memref<1x4xf32, #tpu.memory_space<vmem>>, vector<1x4xf32>
    %c0_62 = arith.constant 0 : index
    %c0_63 = arith.constant 0 : index
    %62 = vector.load %arg22[%c0_62, %c0_63] : memref<32x4xbf16, #tpu.memory_space<vmem>>, vector<32x4xbf16>
    %cst_64 = arith.constant dense<0.000000e+00> : vector<16x4xf32>
    %63 = tpu.matmul %58, %60, %cst_64 {dimension_numbers = #tpu.dot_dimension_numbers<[1], [0], [0], [1], [0, 0, 1, 1], [], []>} : vector<16x32xbf16>, vector<32x4xbf16>, vector<16x4xf32> -> vector<16x4xf32>
    %64 = arith.truncf %63 : vector<16x4xf32> to vector<16x4xbf16>
    %cst_65 = arith.constant dense<0.000000e+00> : vector<16x4xf32>
    %65 = tpu.matmul %57, %64, %cst_65 {dimension_numbers = #tpu.dot_dimension_numbers<[1], [0], [0], [1], [0, 0, 1, 1], [], []>} : vector<16x16xbf16>, vector<16x4xbf16>, vector<16x4xf32> -> vector<16x4xf32>
    %cst_66 = arith.constant dense<0.000000e+00> : vector<16x4xf32>
    %66 = tpu.matmul %59, %62, %cst_66 {dimension_numbers = #tpu.dot_dimension_numbers<[1], [0], [0], [1], [0, 0, 1, 1], [], []>} : vector<16x32xbf16>, vector<32x4xbf16>, vector<16x4xf32> -> vector<16x4xf32>
    %67 = vector.broadcast %61 : vector<1x4xf32> to vector<16x4xf32>
    %68 = arith.addf %65, %67 : vector<16x4xf32>
    %69 = arith.addf %68, %66 : vector<16x4xf32>
    %70 = arith.addf %56, %69 : vector<16x4xf32>
    %c0_67 = arith.constant 0 : index
    %c0_68 = arith.constant 0 : index
    %71 = vector.load %arg23[%c0_67, %c0_68] : memref<16x1xi32, #tpu.memory_space<vmem>>, vector<16x1xi32>
    %cst_69 = arith.constant dense<0xFF800000> : vector<16xf32>
    %72 = vector.multi_reduction <maximumf>, %70, %cst_69 [1] : vector<16x4xf32> to vector<16xf32>
    %73 = vector.shape_cast %72 : vector<16xf32> to vector<16x1xf32>
    %74 = vector.broadcast %73 : vector<16x1xf32> to vector<16x4xf32>
    %75 = arith.subf %70, %74 : vector<16x4xf32>
    %76 = math.exp %75 : vector<16x4xf32>
    %cst_70 = arith.constant dense<0.000000e+00> : vector<16xf32>
    %77 = vector.multi_reduction <add>, %76, %cst_70 [1] : vector<16x4xf32> to vector<16xf32>
    %78 = vector.shape_cast %77 : vector<16xf32> to vector<16x1xf32>
    %79 = math.log %78 : vector<16x1xf32>
    %80 = arith.addf %79, %73 : vector<16x1xf32>
    %81 = tpu.iota {dimensions = array<i32: 1>} : vector<16x4xi32>
    %82 = vector.broadcast %71 : vector<16x1xi32> to vector<16x4xi32>
    %83 = arith.cmpi eq, %81, %82 : vector<16x4xi32>
    %cst_71 = arith.constant 0.000000e+00 : f32
    %84 = vector.broadcast %cst_71 : f32 to vector<16x4xf32>
    %85 = arith.select %83, %70, %84 : vector<16x4xi1>, vector<16x4xf32>
    %cst_72 = arith.constant dense<0.000000e+00> : vector<16xf32>
    %86 = vector.multi_reduction <add>, %85, %cst_72 [1] : vector<16x4xf32> to vector<16xf32>
    %87 = vector.shape_cast %86 : vector<16xf32> to vector<16x1xf32>
    %c0_i32 = arith.constant 0 : i32
    %88 = vector.broadcast %c0_i32 : i32 to vector<16x1xi32>
    %89 = arith.cmpi sge, %71, %88 : vector<16x1xi32>
    %90 = arith.extui %89 : vector<16x1xi1> to vector<16x1xi32>
    %91 = arith.sitofp %90 : vector<16x1xi32> to vector<16x1xf32>
    %92 = arith.subf %80, %87 : vector<16x1xf32>
    %93 = arith.mulf %92, %91 : vector<16x1xf32>
    %cst_73 = arith.constant dense<0.000000e+00> : vector<1xf32>
    %94 = vector.multi_reduction <add>, %93, %cst_73 [0] : vector<16x1xf32> to vector<1xf32>
    %95 = vector.shape_cast %94 : vector<1xf32> to vector<1x1xf32>
    %cst_74 = arith.constant 1.600000e+01 : f32
    %96 = vector.broadcast %cst_74 : f32 to vector<1x1xf32>
    %97 = arith.divf %95, %96 : vector<1x1xf32>
    %c0_75 = arith.constant 0 : index
    %c0_76 = arith.constant 0 : index
    %98 = vector.load %arg24[%c0_75, %c0_76] : memref<1x1xf32, #tpu.memory_space<vmem>>, vector<1x1xf32>
    tpu.vector_store %arg24[%c0_75, %c0_76], %97 {strides = array<i32>} : memref<1x1xf32, #tpu.memory_space<vmem>>, vector<1x1xf32>,
    return
  }
}

</mosaic_0001>

<llo_original>
// kernel: tpu_custom_call.1
$region0: #{tpu_custom_call.1}
  #allocation0 [shape = 'u32[]', space=smem, size = 0x4, offset = 0x4, fixed_abs, tag = 'smem constant byte address 0x4 - core index']
  #allocation1 [shape = 'u32[144,128]{1,0:T(1,128)}', space=vmem, size = 0x12000, scoped, tag = 'internal scratch']
  %s0 = inlined_call_operand.vmem [shape: bf16[16,16], index: 0, kind: input, shape index: {}]
  %s1 = inlined_call_operand.vmem [shape: bf16[16,16], index: 1, kind: input, shape index: {}]
  %s2 = inlined_call_operand.vmem [shape: bf16[16,16], index: 2, kind: input, shape index: {}]
  %s3 = inlined_call_operand.vmem [shape: bf16[16,128], index: 3, kind: input, shape index: {}]
  %s4 = inlined_call_operand.vmem [shape: bf16[16,128], index: 4, kind: input, shape index: {}]
  %s5 = inlined_call_operand.vmem [shape: bf16[128,32], index: 5, kind: input, shape index: {}]
  %s6 = inlined_call_operand.vmem [shape: f32[1,32], index: 6, kind: input, shape index: {}]
  %s7 = inlined_call_operand.vmem [shape: bf16[128,32], index: 7, kind: input, shape index: {}]
  %s8 = inlined_call_operand.vmem [shape: bf16[128,32], index: 8, kind: input, shape index: {}]
  %s9 = inlined_call_operand.vmem [shape: f32[1,32], index: 9, kind: input, shape index: {}]
  %s10 = inlined_call_operand.vmem [shape: bf16[128,32], index: 10, kind: input, shape index: {}]
  %s11 = inlined_call_operand.vmem [shape: bf16[128,32], index: 11, kind: input, shape index: {}]
  %s12 = inlined_call_operand.vmem [shape: f32[1,32], index: 12, kind: input, shape index: {}]
  %s13 = inlined_call_operand.vmem [shape: bf16[128,32], index: 13, kind: input, shape index: {}]
  %s14 = inlined_call_operand.vmem [shape: bf16[32,4], index: 14, kind: input, shape index: {}]
  %s15 = inlined_call_operand.vmem [shape: f32[1,4], index: 15, kind: input, shape index: {}]
  %s16 = inlined_call_operand.vmem [shape: bf16[32,4], index: 16, kind: input, shape index: {}]
  %s17 = inlined_call_operand.vmem [shape: bf16[32,4], index: 17, kind: input, shape index: {}]
  %s18 = inlined_call_operand.vmem [shape: f32[1,4], index: 18, kind: input, shape index: {}]
  %s19 = inlined_call_operand.vmem [shape: bf16[32,4], index: 19, kind: input, shape index: {}]
  %s20 = inlined_call_operand.vmem [shape: bf16[32,4], index: 20, kind: input, shape index: {}]
  %s21 = inlined_call_operand.vmem [shape: f32[1,4], index: 21, kind: input, shape index: {}]
  %s22 = inlined_call_operand.vmem [shape: bf16[32,4], index: 22, kind: input, shape index: {}]
  %s23 = inlined_call_operand.vmem [shape: s32[16,1], index: 23, kind: input, shape index: {}]
  %s24 = inlined_call_operand.hbm [shape: f32[1,1], index: 24, kind: output, shape index: {}]
  %s25 = sld [smem:[#allocation0]]
  $region106: #{tpu_custom_call.1} parent=0
    _
  %s27 = ssub.s32 1, %s25
  %s28 = scalar_select 0, %s27, %s25
  $region1: #{tpu_custom_call.1} parent=0
    #allocation2 [shape = 'u8[512]{0}', space=vmem, size = 0x400, scoped, tag = 'output window, operand 0, single buffered']
    #allocation3 [shape = 's32[1]{0}', space=sflag, size = 0x4, scoped, tag = 'scoped memory for tpu_custom_call.1']
    %29 = vsyncpa [#allocation3], 0
    // Predicated region
    $region2: #{tpu_custom_call.1} parent=1 // pred_check
      _
    $region3: #{tpu_custom_call.1} parent=1 // pred_check_branch
      %31 = sbr.rel (0) target = $region5
    $region4: #{tpu_custom_call.1} parent=1 // pred_region
      _
    $region5: #{tpu_custom_call.1} parent=1 // pred_fallthru
      _
    // Predicated region
    $region6: #{tpu_custom_call.1} parent=1 // pred_check
      _
    $region7: #{tpu_custom_call.1} parent=1 // pred_check_branch
      %33 = sbr.rel (0) target = $region9
    $region8: #{tpu_custom_call.1} parent=1 // pred_region
      _
    $region9: #{tpu_custom_call.1} parent=1 // pred_fallthru
      _
    // Predicated region
    $region10: #{tpu_custom_call.1} parent=1 // pred_check
      _
    $region11: #{tpu_custom_call.1} parent=1 // pred_check_branch
      %35 = sbr.rel (0) target = $region13
    $region12: #{tpu_custom_call.1} parent=1 // pred_region
      _
    $region13: #{tpu_custom_call.1} parent=1 // pred_fallthru
      _
    // Predicated region
    $region14: #{tpu_custom_call.1} parent=1 // pred_check
      _
    $region15: #{tpu_custom_call.1} parent=1 // pred_check_branch
      %37 = sbr.rel (0) target = $region17
    $region16: #{tpu_custom_call.1} parent=1 // pred_region
      _
    $region17: #{tpu_custom_call.1} parent=1 // pred_fallthru
      _
    // Predicated region
    $region18: #{tpu_custom_call.1} parent=1 // pred_check
      _
    $region19: #{tpu_custom_call.1} parent=1 // pred_check_branch
      %39 = sbr.rel (0) target = $region21
    $region20: #{tpu_custom_call.1} parent=1 // pred_region
      _
    $region21: #{tpu_custom_call.1} parent=1 // pred_fallthru
      _
    // Predicated region
    $region22: #{tpu_custom_call.1} parent=1 // pred_check
      _
    $region23: #{tpu_custom_call.1} parent=1 // pred_check_branch
      %41 = sbr.rel (0) target = $region25
    $region24: #{tpu_custom_call.1} parent=1 // pred_region
      _
    $region25: #{tpu_custom_call.1} parent=1 // pred_fallthru
      _
    // Predicated region
    $region26: #{tpu_custom_call.1} parent=1 // pred_check
      _
    $region27: #{tpu_custom_call.1} parent=1 // pred_check_branch
      %43 = sbr.rel (0) target = $region29
    $region28: #{tpu_custom_call.1} parent=1 // pred_region
      _
    $region29: #{tpu_custom_call.1} parent=1 // pred_fallthru
      _
    // Predicated region
    $region30: #{tpu_custom_call.1} parent=1 // pred_check
      _
    $region31: #{tpu_custom_call.1} parent=1 // pred_check_branch
      %45 = sbr.rel (0) target = $region33
    $region32: #{tpu_custom_call.1} parent=1 // pred_region
      _
    $region33: #{tpu_custom_call.1} parent=1 // pred_fallthru
      _
    // Predicated region
    $region34: #{tpu_custom_call.1} parent=1 // pred_check
      _
    $region35: #{tpu_custom_call.1} parent=1 // pred_check_branch
      %47 = sbr.rel (0) target = $region37
    $region36: #{tpu_custom_call.1} parent=1 // pred_region
      _
    $region37: #{tpu_custom_call.1} parent=1 // pred_fallthru
      _
    // Predicated region
    $region38: #{tpu_custom_call.1} parent=1 // pred_check
      _
    $region39: #{tpu_custom_call.1} parent=1 // pred_check_branch
      %49 = sbr.rel (0) target = $region41
    $region40: #{tpu_custom_call.1} parent=1 // pred_region
      _
    $region41: #{tpu_custom_call.1} parent=1 // pred_fallthru
      _
    // Predicated region
    $region42: #{tpu_custom_call.1} parent=1 // pred_check
      _
    $region43: #{tpu_custom_call.1} parent=1 // pred_check_branch
      %51 = sbr.rel (0) target = $region45
    $region44: #{tpu_custom_call.1} parent=1 // pred_region
      _
    $region45: #{tpu_custom_call.1} parent=1 // pred_fallthru
      _
    // Predicated region
    $region46: #{tpu_custom_call.1} parent=1 // pred_check
      _
    $region47: #{tpu_custom_call.1} parent=1 // pred_check_branch
      %53 = sbr.rel (0) target = $region49
    $region48: #{tpu_custom_call.1} parent=1 // pred_region
      _
    $region49: #{tpu_custom_call.1} parent=1 // pred_fallthru
      _
    // Predicated region
    $region50: #{tpu_custom_call.1} parent=1 // pred_check
      _
    $region51: #{tpu_custom_call.1} parent=1 // pred_check_branch
      %55 = sbr.rel (0) target = $region53
    $region52: #{tpu_custom_call.1} parent=1 // pred_region
      _
    $region53: #{tpu_custom_call.1} parent=1 // pred_fallthru
      _
    // Predicated region
    $region54: #{tpu_custom_call.1} parent=1 // pred_check
      _
    $region55: #{tpu_custom_call.1} parent=1 // pred_check_branch
      %57 = sbr.rel (0) target = $region57
    $region56: #{tpu_custom_call.1} parent=1 // pred_region
      _
    $region57: #{tpu_custom_call.1} parent=1 // pred_fallthru
      _
    // Predicated region
    $region58: #{tpu_custom_call.1} parent=1 // pred_check
      _
    $region59: #{tpu_custom_call.1} parent=1 // pred_check_branch
      %59 = sbr.rel (0) target = $region61
    $region60: #{tpu_custom_call.1} parent=1 // pred_region
      _
    $region61: #{tpu_custom_call.1} parent=1 // pred_fallthru
      _
    // Predicated region
    $region62: #{tpu_custom_call.1} parent=1 // pred_check
      _
    $region63: #{tpu_custom_call.1} parent=1 // pred_check_branch
      %61 = sbr.rel (0) target = $region65
    $region64: #{tpu_custom_call.1} parent=1 // pred_region
      _
    $region65: #{tpu_custom_call.1} parent=1 // pred_fallthru
      _
    // Predicated region
    $region66: #{tpu_custom_call.1} parent=1 // pred_check
      _
    $region67: #{tpu_custom_call.1} parent=1 // pred_check_branch
      %63 = sbr.rel (0) target = $region69
    $region68: #{tpu_custom_call.1} parent=1 // pred_region
      _
    $region69: #{tpu_custom_call.1} parent=1 // pred_fallthru
      _
    // Predicated region
    $region70: #{tpu_custom_call.1} parent=1 // pred_check
      _
    $region71: #{tpu_custom_call.1} parent=1 // pred_check_branch
      %65 = sbr.rel (0) target = $region73
    $region72: #{tpu_custom_call.1} parent=1 // pred_region
      _
    $region73: #{tpu_custom_call.1} parent=1 // pred_fallthru
      _
    // Predicated region
    $region74: #{tpu_custom_call.1} parent=1 // pred_check
      _
    $region75: #{tpu_custom_call.1} parent=1 // pred_check_branch
      %67 = sbr.rel (0) target = $region77
    $region76: #{tpu_custom_call.1} parent=1 // pred_region
      _
    $region77: #{tpu_custom_call.1} parent=1 // pred_fallthru
      _
    // Predicated region
    $region78: #{tpu_custom_call.1} parent=1 // pred_check
      _
    $region79: #{tpu_custom_call.1} parent=1 // pred_check_branch
      %69 = sbr.rel (0) target = $region81
    $region80: #{tpu_custom_call.1} parent=1 // pred_region
      _
    $region81: #{tpu_custom_call.1} parent=1 // pred_fallthru
      _
    // Predicated region
    $region82: #{tpu_custom_call.1} parent=1 // pred_check
      _
    $region83: #{tpu_custom_call.1} parent=1 // pred_check_branch
      %71 = sbr.rel (0) target = $region85
    $region84: #{tpu_custom_call.1} parent=1 // pred_region
      _
    $region85: #{tpu_custom_call.1} parent=1 // pred_fallthru
      _
    // Predicated region
    $region86: #{tpu_custom_call.1} parent=1 // pred_check
      _
    $region87: #{tpu_custom_call.1} parent=1 // pred_check_branch
      %73 = sbr.rel (0) target = $region89
    $region88: #{tpu_custom_call.1} parent=1 // pred_region
      _
    $region89: #{tpu_custom_call.1} parent=1 // pred_fallthru
      _
    // Predicated region
    $region90: #{tpu_custom_call.1} parent=1 // pred_check
      _
    $region91: #{tpu_custom_call.1} parent=1 // pred_check_branch
      %75 = sbr.rel (0) target = $region93
    $region92: #{tpu_custom_call.1} parent=1 // pred_region
      _
    $region93: #{tpu_custom_call.1} parent=1 // pred_fallthru
      _
    // Predicated region
    $region94: #{tpu_custom_call.1} parent=1 // pred_check
      _
    $region95: #{tpu_custom_call.1} parent=1 // pred_check_branch
      %77 = sbr.rel (0) target = $region97
    $region96: #{tpu_custom_call.1} parent=1 // pred_region
      _
    $region97: #{tpu_custom_call.1} parent=1 // pred_fallthru
      _
    %v79 = vld [vmem:[%s0] sm:$0xf]
    %v80 = vld [vmem:[%s0 + $0x4] sm:$0xf]
    %v81 = vld [vmem:[%s3] sm:$0xf]
    %v82 = vld [vmem:[%s3 + $0x4] sm:$0xf]
    %v83 = vld [vmem:[%s5] sm:$0xf]
    %v84 = vld [vmem:[%s5 + $0x4] sm:$0xf]
    %v85 = vld [vmem:[%s5 + $0x8] sm:$0xf]
    %v86 = vld [vmem:[%s5 + $0xc] sm:$0xf]
    %v87 = vld [vmem:[%s5 + $0x10] sm:$0xf]
    %v88 = vld [vmem:[%s5 + $0x14] sm:$0xf]
    %v89 = vld [vmem:[%s5 + $0x18] sm:$0xf]
    %v90 = vld [vmem:[%s5 + $0x1c] sm:$0xf]
    %v91 = vld [vmem:[%s5 + $0x20] sm:$0xf]
    %v92 = vld [vmem:[%s5 + $0x24] sm:$0xf]
    %v93 = vld [vmem:[%s5 + $0x28] sm:$0xf]
    %v94 = vld [vmem:[%s5 + $0x2c] sm:$0xf]
    %v95 = vld [vmem:[%s5 + $0x30] sm:$0xf]
    %v96 = vld [vmem:[%s5 + $0x34] sm:$0xf]
    %v97 = vld [vmem:[%s5 + $0x38] sm:$0xf]
    %v98 = vld [vmem:[%s5 + $0x3c] sm:$0xf]
    %v99 = vld [vmem:[%s6] sm:$0x1]
    %v100 = vld [vmem:[%s7] sm:$0xf]
    %v101 = vld [vmem:[%s7 + $0x4] sm:$0xf]
    %v102 = vld [vmem:[%s7 + $0x8] sm:$0xf]
    %v103 = vld [vmem:[%s7 + $0xc] sm:$0xf]
    %v104 = vld [vmem:[%s7 + $0x10] sm:$0xf]
    %v105 = vld [vmem:[%s7 + $0x14] sm:$0xf]
    %v106 = vld [vmem:[%s7 + $0x18] sm:$0xf]
    %v107 = vld [vmem:[%s7 + $0x1c] sm:$0xf]
    %v108 = vld [vmem:[%s7 + $0x20] sm:$0xf]
    %v109 = vld [vmem:[%s7 + $0x24] sm:$0xf]
    %v110 = vld [vmem:[%s7 + $0x28] sm:$0xf]
    %v111 = vld [vmem:[%s7 + $0x2c] sm:$0xf]
    %v112 = vld [vmem:[%s7 + $0x30] sm:$0xf]
    %v113 = vld [vmem:[%s7 + $0x34] sm:$0xf]
    %v114 = vld [vmem:[%s7 + $0x38] sm:$0xf]
    %v115 = vld [vmem:[%s7 + $0x3c] sm:$0xf]
    %v118 = vunpack.c.l.b16 %v81
    %v119 = vunpack.c.l.b16 %v82
    %v120 = vpack.c.b16 %v119, %v118
    %v138 = vunpack.c.l.b16 %v83
    %v139 = vunpack.c.l.b16 %v84
    %v140 = vunpack.c.l.b16 %v85
    %v141 = vunpack.c.l.b16 %v86
    %v142 = vunpack.c.l.b16 %v87
    %v143 = vunpack.c.l.b16 %v88
    %v144 = vunpack.c.l.b16 %v89
    %v145 = vunpack.c.l.b16 %v90
    %v146 = vunpack.c.l.b16 %v91
    %v147 = vunpack.c.l.b16 %v92
    %v148 = vunpack.c.l.b16 %v93
    %v149 = vunpack.c.l.b16 %v94
    %v150 = vunpack.c.l.b16 %v95
    %v151 = vunpack.c.l.b16 %v96
    %v152 = vunpack.c.l.b16 %v97
    %v153 = vunpack.c.l.b16 %v98
    %v154 = vpack.c.b16 %v139, %v138
    %v155 = vpack.c.b16 %v141, %v140
    %v156 = vpack.c.b16 %v143, %v142
    %v157 = vpack.c.b16 %v145, %v144
    %v158 = vpack.c.b16 %v147, %v146
    %v159 = vpack.c.b16 %v149, %v148
    %v160 = vpack.c.b16 %v151, %v150
    %v161 = vpack.c.b16 %v153, %v152
    %170 = vmatprep.subr.bf16.mxu0 0
    %171 = vmatpush1.bf16.msra.mxu0 %v154
    %172 = vmatprep.subr.bf16.mxu0 0
    %173 = vmatpush1.bf16.msra.mxu0 %v155
    %174 = vmatprep.subr.bf16.mxu0 0
    %175 = vmatpush1.bf16.msra.mxu0 %v156
    %176 = vmatprep.subr.bf16.mxu0 0
    %177 = vmatpush1.bf16.msra.mxu0 %v157
    %178 = vmatprep.subr.bf16.mxu0 0
    %179 = vmatpush1.bf16.msra.mxu0 %v158
    %180 = vmatprep.subr.bf16.mxu0 0
    %181 = vmatpush1.bf16.msra.mxu0 %v159
    %182 = vmatprep.subr.bf16.mxu0 0
    %183 = vmatpush1.bf16.msra.mxu0 %v160
    %184 = vmatprep.subr.bf16.mxu0 0
    %185 = vmatpush1.bf16.msra.mxu0 %v161
    %186 = vmatprep.subr.bf16.mxu0 0
    %187 = vmatpush1.bf16.msra.mxu0 0
    %188 = vmatprep.subr.bf16.mxu0 0
    %189 = vmatpush1.bf16.msra.mxu0 0
    %190 = vmatprep.subr.bf16.mxu0 0
    %191 = vmatpush1.bf16.msra.mxu0 0
    %192 = vmatprep.subr.bf16.mxu0 0
    %193 = vmatpush1.bf16.msra.mxu0 0
    %194 = vmatprep.subr.bf16.mxu0 0
    %195 = vmatpush1.bf16.msra.mxu0 0
    %196 = vmatprep.subr.bf16.mxu0 0
    %197 = vmatpush1.bf16.msra.mxu0 0
    %198 = vmatprep.subr.bf16.mxu0 0
    %199 = vmatpush1.bf16.msra.mxu0 0
    %200 = vmatprep.subr.bf16.mxu0 0
    %201 = vmatpush1.bf16.msra.mxu0 0
    %202 = vmatprep.mubr.bf16.mxu0 0
    %203 = vmatmul.mubr.bf16.gmra.mrb[0].mxu0 %v120
    %v204 = vpop.f32.mrb[0].mxu0
    %v205 = vadd.f32 0.0, %v204
    %v206 = vpop.f32.mrb[0].mxu0
    %v207 = vpop.f32.mrb[0].mxu0
    %v208 = vadd.f32 0.0, %v207
    %v209 = vpop.f32.mrb[0].mxu0
    %210 = vdwg.mxu0
    %v211 = vpack.c.bf16 %v208, %v205
    %v228 = vunpack.c.l.b16 %v100
    %v229 = vunpack.c.l.b16 %v101
    %v230 = vunpack.c.l.b16 %v102
    %v231 = vunpack.c.l.b16 %v103
    %v232 = vunpack.c.l.b16 %v104
    %v233 = vunpack.c.l.b16 %v105
    %v234 = vunpack.c.l.b16 %v106
    %v235 = vunpack.c.l.b16 %v107
    %v236 = vunpack.c.l.b16 %v108
    %v237 = vunpack.c.l.b16 %v109
    %v238 = vunpack.c.l.b16 %v110
    %v239 = vunpack.c.l.b16 %v111
    %v240 = vunpack.c.l.b16 %v112
    %v241 = vunpack.c.l.b16 %v113
    %v242 = vunpack.c.l.b16 %v114
    %v243 = vunpack.c.l.b16 %v115
    %v244 = vpack.c.b16 %v229, %v228
    %v245 = vpack.c.b16 %v231, %v230
    %v246 = vpack.c.b16 %v233, %v232
    %v247 = vpack.c.b16 %v235, %v234
    %v248 = vpack.c.b16 %v237, %v236
    %v249 = vpack.c.b16 %v239, %v238
    %v250 = vpack.c.b16 %v241, %v240
    %v251 = vpack.c.b16 %v243, %v242
    %260 = vmatprep.subr.bf16.mxu0 0
    %261 = vmatpush1.bf16.msra.mxu0 %v244
    %262 = vmatprep.subr.bf16.mxu0 0
    %263 = vmatpush1.bf16.msra.mxu0 %v245
    %264 = vmatprep.subr.bf16.mxu0 0
    %265 = vmatpush1.bf16.msra.mxu0 %v246
    %266 = vmatprep.subr.bf16.mxu0 0
    %267 = vmatpush1.bf16.msra.mxu0 %v247
    %268 = vmatprep.subr.bf16.mxu0 0
    %269 = vmatpush1.bf16.msra.mxu0 %v248
    %270 = vmatprep.subr.bf16.mxu0 0
    %271 = vmatpush1.bf16.msra.mxu0 %v249
    %272 = vmatprep.subr.bf16.mxu0 0
    %273 = vmatpush1.bf16.msra.mxu0 %v250
    %274 = vmatprep.subr.bf16.mxu0 0
    %275 = vmatpush1.bf16.msra.mxu0 %v251
    %276 = vmatprep.subr.bf16.mxu0 0
    %277 = vmatpush1.bf16.msra.mxu0 0
    %278 = vmatprep.subr.bf16.mxu0 0
    %279 = vmatpush1.bf16.msra.mxu0 0
    %280 = vmatprep.subr.bf16.mxu0 0
    %281 = vmatpush1.bf16.msra.mxu0 0
    %282 = vmatprep.subr.bf16.mxu0 0
    %283 = vmatpush1.bf16.msra.mxu0 0
    %284 = vmatprep.subr.bf16.mxu0 0
    %285 = vmatpush1.bf16.msra.mxu0 0
    %286 = vmatprep.subr.bf16.mxu0 0
    %287 = vmatpush1.bf16.msra.mxu0 0
    %288 = vmatprep.subr.bf16.mxu0 0
    %289 = vmatpush1.bf16.msra.mxu0 0
    %290 = vmatprep.subr.bf16.mxu0 0
    %291 = vmatpush1.bf16.msra.mxu0 0
    %292 = vmatprep.mubr.bf16.mxu0 0
    %293 = vmatmul.mubr.bf16.gmra.mrb[0].mxu0 %v120
    %v294 = vpop.f32.mrb[0].mxu0
    %v295 = vadd.f32 0.0, %v294
    %v296 = vpop.f32.mrb[0].mxu0
    %v297 = vpop.f32.mrb[0].mxu0
    %v298 = vadd.f32 0.0, %v297
    %v299 = vpop.f32.mrb[0].mxu0
    %300 = vdwg.mxu0
    %v302 = vlaneseq
    %v303 = vshrl.u32 %v302, 7
    %v304 = vsub.s32 0, %v303
    %v305 = vrot.slane %v99, %v304
    %v309 = vunpack.c.l.b16 %v79
    %v310 = vunpack.c.l.b16 %v80
    %v311 = vpack.c.b16 %v310, %v309
    %vm312 = vcmask 130048
    %v314 = vsel %vm312, %v311, 0
    %316 = vmatprep.subr.bf16.mxu0 0
    %317 = vmatpush1.bf16.msra.mxu0 %v211
    %318 = vmatprep.subr.bf16.mxu0 0
    %319 = vmatpush1.bf16.msra.mxu0 0
    %320 = vmatprep.subr.bf16.mxu0 0
    %321 = vmatpush1.bf16.msra.mxu0 0
    %322 = vmatprep.subr.bf16.mxu0 0
    %323 = vmatpush1.bf16.msra.mxu0 0
    %324 = vmatprep.subr.bf16.mxu0 0
    %325 = vmatpush1.bf16.msra.mxu0 0
    %326 = vmatprep.subr.bf16.mxu0 0
    %327 = vmatpush1.bf16.msra.mxu0 0
    %328 = vmatprep.subr.bf16.mxu0 0
    %329 = vmatpush1.bf16.msra.mxu0 0
    %330 = vmatprep.subr.bf16.mxu0 0
    %331 = vmatpush1.bf16.msra.mxu0 0
    %332 = vmatprep.subr.bf16.mxu0 0
    %333 = vmatpush1.bf16.msra.mxu0 0
    %334 = vmatprep.subr.bf16.mxu0 0
    %335 = vmatpush1.bf16.msra.mxu0 0
    %336 = vmatprep.subr.bf16.mxu0 0
    %337 = vmatpush1.bf16.msra.mxu0 0
    %338 = vmatprep.subr.bf16.mxu0 0
    %339 = vmatpush1.bf16.msra.mxu0 0
    %340 = vmatprep.subr.bf16.mxu0 0
    %341 = vmatpush1.bf16.msra.mxu0 0
    %342 = vmatprep.subr.bf16.mxu0 0
    %343 = vmatpush1.bf16.msra.mxu0 0
    %344 = vmatprep.subr.bf16.mxu0 0
    %345 = vmatpush1.bf16.msra.mxu0 0
    %346 = vmatprep.subr.bf16.mxu0 0
    %347 = vmatpush1.bf16.msra.mxu0 0
    %348 = vmatprep.mubr.bf16.mxu0 0
    %349 = vmatmul.mubr.bf16.gmra.mrb[0].mxu0 %v314
    %v350 = vpop.f32.mrb[0].mxu0
    %v351 = vadd.f32 %v305, %v350
    %v352 = vpop.f32.mrb[0].mxu0
    %v353 = vpop.f32.mrb[0].mxu0
    %v354 = vadd.f32 %v305, %v353
    %v355 = vpop.f32.mrb[0].mxu0
    %356 = vdwg.mxu0
    %v357 = vadd.f32 %v351, %v295
    %v358 = vadd.f32 %v354, %v298
    %v359 = vld [vmem:[%s1] sm:$0xf]
    %v360 = vld [vmem:[%s1 + $0x4] sm:$0xf]
    %v361 = vld [vmem:[%s4] sm:$0xf]
    %v362 = vld [vmem:[%s4 + $0x4] sm:$0xf]
    %v363 = vld [vmem:[%s8] sm:$0xf]
    %v364 = vld [vmem:[%s8 + $0x4] sm:$0xf]
    %v365 = vld [vmem:[%s8 + $0x8] sm:$0xf]
    %v366 = vld [vmem:[%s8 + $0xc] sm:$0xf]
    %v367 = vld [vmem:[%s8 + $0x10] sm:$0xf]
    %v368 = vld [vmem:[%s8 + $0x14] sm:$0xf]
    %v369 = vld [vmem:[%s8 + $0x18] sm:$0xf]
    %v370 = vld [vmem:[%s8 + $0x1c] sm:$0xf]
    %v371 = vld [vmem:[%s8 + $0x20] sm:$0xf]
    %v372 = vld [vmem:[%s8 + $0x24] sm:$0xf]
    %v373 = vld [vmem:[%s8 + $0x28] sm:$0xf]
    %v374 = vld [vmem:[%s8 + $0x2c] sm:$0xf]
    %v375 = vld [vmem:[%s8 + $0x30] sm:$0xf]
    %v376 = vld [vmem:[%s8 + $0x34] sm:$0xf]
    %v377 = vld [vmem:[%s8 + $0x38] sm:$0xf]
    %v378 = vld [vmem:[%s8 + $0x3c] sm:$0xf]
    %v379 = vld [vmem:[%s9] sm:$0x1]
    %v380 = vld [vmem:[%s10] sm:$0xf]
    %v381 = vld [vmem:[%s10 + $0x4] sm:$0xf]
    %v382 = vld [vmem:[%s10 + $0x8] sm:$0xf]
    %v383 = vld [vmem:[%s10 + $0xc] sm:$0xf]
    %v384 = vld [vmem:[%s10 + $0x10] sm:$0xf]
    %v385 = vld [vmem:[%s10 + $0x14] sm:$0xf]
    %v386 = vld [vmem:[%s10 + $0x18] sm:$0xf]
    %v387 = vld [vmem:[%s10 + $0x1c] sm:$0xf]
    %v388 = vld [vmem:[%s10 + $0x20] sm:$0xf]
    %v389 = vld [vmem:[%s10 + $0x24] sm:$0xf]
    %v390 = vld [vmem:[%s10 + $0x28] sm:$0xf]
    %v391 = vld [vmem:[%s10 + $0x2c] sm:$0xf]
    %v392 = vld [vmem:[%s10 + $0x30] sm:$0xf]
    %v393 = vld [vmem:[%s10 + $0x34] sm:$0xf]
    %v394 = vld [vmem:[%s10 + $0x38] sm:$0xf]
    %v395 = vld [vmem:[%s10 + $0x3c] sm:$0xf]
    %v412 = vunpack.c.l.b16 %v363
    %v413 = vunpack.c.l.b16 %v364
    %v414 = vunpack.c.l.b16 %v365
    %v415 = vunpack.c.l.b16 %v366
    %v416 = vunpack.c.l.b16 %v367
    %v417 = vunpack.c.l.b16 %v368
    %v418 = vunpack.c.l.b16 %v369
    %v419 = vunpack.c.l.b16 %v370
    %v420 = vunpack.c.l.b16 %v371
    %v421 = vunpack.c.l.b16 %v372
    %v422 = vunpack.c.l.b16 %v373
    %v423 = vunpack.c.l.b16 %v374
    %v424 = vunpack.c.l.b16 %v375
    %v425 = vunpack.c.l.b16 %v376
    %v426 = vunpack.c.l.b16 %v377
    %v427 = vunpack.c.l.b16 %v378
    %v428 = vpack.c.b16 %v413, %v412
    %v429 = vpack.c.b16 %v415, %v414
    %v430 = vpack.c.b16 %v417, %v416
    %v431 = vpack.c.b16 %v419, %v418
    %v432 = vpack.c.b16 %v421, %v420
    %v433 = vpack.c.b16 %v423, %v422
    %v434 = vpack.c.b16 %v425, %v424
    %v435 = vpack.c.b16 %v427, %v426
    %444 = vmatprep.subr.bf16.mxu0 0
    %445 = vmatpush1.bf16.msra.mxu0 %v428
    %446 = vmatprep.subr.bf16.mxu0 0
    %447 = vmatpush1.bf16.msra.mxu0 %v429
    %448 = vmatprep.subr.bf16.mxu0 0
    %449 = vmatpush1.bf16.msra.mxu0 %v430
    %450 = vmatprep.subr.bf16.mxu0 0
    %451 = vmatpush1.bf16.msra.mxu0 %v431
    %452 = vmatprep.subr.bf16.mxu0 0
    %453 = vmatpush1.bf16.msra.mxu0 %v432
    %454 = vmatprep.subr.bf16.mxu0 0
    %455 = vmatpush1.bf16.msra.mxu0 %v433
    %456 = vmatprep.subr.bf16.mxu0 0
    %457 = vmatpush1.bf16.msra.mxu0 %v434
    %458 = vmatprep.subr.bf16.mxu0 0
    %459 = vmatpush1.bf16.msra.mxu0 %v435
    %460 = vmatprep.subr.bf16.mxu0 0
    %461 = vmatpush1.bf16.msra.mxu0 0
    %462 = vmatprep.subr.bf16.mxu0 0
    %463 = vmatpush1.bf16.msra.mxu0 0
    %464 = vmatprep.subr.bf16.mxu0 0
    %465 = vmatpush1.bf16.msra.mxu0 0
    %466 = vmatprep.subr.bf16.mxu0 0
    %467 = vmatpush1.bf16.msra.mxu0 0
    %468 = vmatprep.subr.bf16.mxu0 0
    %469 = vmatpush1.bf16.msra.mxu0 0
    %470 = vmatprep.subr.bf16.mxu0 0
    %471 = vmatpush1.bf16.msra.mxu0 0
    %472 = vmatprep.subr.bf16.mxu0 0
    %473 = vmatpush1.bf16.msra.mxu0 0
    %474 = vmatprep.subr.bf16.mxu0 0
    %475 = vmatpush1.bf16.msra.mxu0 0
    %476 = vmatprep.mubr.bf16.mxu0 0
    %477 = vmatmul.mubr.bf16.gmra.mrb[0].mxu0 %v120
    %v478 = vpop.f32.mrb[0].mxu0
    %v479 = vadd.f32 0.0, %v478
    %v480 = vpop.f32.mrb[0].mxu0
    %v481 = vpop.f32.mrb[0].mxu0
    %v482 = vadd.f32 0.0, %v481
    %v483 = vpop.f32.mrb[0].mxu0
    %484 = vdwg.mxu0
    %v485 = vpack.c.bf16 %v482, %v479
    %v488 = vunpack.c.l.b16 %v361
    %v489 = vunpack.c.l.b16 %v362
    %v490 = vpack.c.b16 %v489, %v488
    %v508 = vunpack.c.l.b16 %v380
    %v509 = vunpack.c.l.b16 %v381
    %v510 = vunpack.c.l.b16 %v382
    %v511 = vunpack.c.l.b16 %v383
    %v512 = vunpack.c.l.b16 %v384
    %v513 = vunpack.c.l.b16 %v385
    %v514 = vunpack.c.l.b16 %v386
    %v515 = vunpack.c.l.b16 %v387
    %v516 = vunpack.c.l.b16 %v388
    %v517 = vunpack.c.l.b16 %v389
    %v518 = vunpack.c.l.b16 %v390
    %v519 = vunpack.c.l.b16 %v391
    %v520 = vunpack.c.l.b16 %v392
    %v521 = vunpack.c.l.b16 %v393
    %v522 = vunpack.c.l.b16 %v394
    %v523 = vunpack.c.l.b16 %v395
    %v524 = vpack.c.b16 %v509, %v508
    %v525 = vpack.c.b16 %v511, %v510
    %v526 = vpack.c.b16 %v513, %v512
    %v527 = vpack.c.b16 %v515, %v514
    %v528 = vpack.c.b16 %v517, %v516
    %v529 = vpack.c.b16 %v519, %v518
    %v530 = vpack.c.b16 %v521, %v520
    %v531 = vpack.c.b16 %v523, %v522
    %540 = vmatprep.subr.bf16.mxu0 0
    %541 = vmatpush1.bf16.msra.mxu0 %v524
    %542 = vmatprep.subr.bf16.mxu0 0
    %543 = vmatpush1.bf16.msra.mxu0 %v525
    %544 = vmatprep.subr.bf16.mxu0 0
    %545 = vmatpush1.bf16.msra.mxu0 %v526
    %546 = vmatprep.subr.bf16.mxu0 0
    %547 = vmatpush1.bf16.msra.mxu0 %v527
    %548 = vmatprep.subr.bf16.mxu0 0
    %549 = vmatpush1.bf16.msra.mxu0 %v528
    %550 = vmatprep.subr.bf16.mxu0 0
    %551 = vmatpush1.bf16.msra.mxu0 %v529
    %552 = vmatprep.subr.bf16.mxu0 0
    %553 = vmatpush1.bf16.msra.mxu0 %v530
    %554 = vmatprep.subr.bf16.mxu0 0
    %555 = vmatpush1.bf16.msra.mxu0 %v531
    %556 = vmatprep.subr.bf16.mxu0 0
    %557 = vmatpush1.bf16.msra.mxu0 0
    %558 = vmatprep.subr.bf16.mxu0 0
    %559 = vmatpush1.bf16.msra.mxu0 0
    %560 = vmatprep.subr.bf16.mxu0 0
    %561 = vmatpush1.bf16.msra.mxu0 0
    %562 = vmatprep.subr.bf16.mxu0 0
    %563 = vmatpush1.bf16.msra.mxu0 0
    %564 = vmatprep.subr.bf16.mxu0 0
    %565 = vmatpush1.bf16.msra.mxu0 0
    %566 = vmatprep.subr.bf16.mxu0 0
    %567 = vmatpush1.bf16.msra.mxu0 0
    %568 = vmatprep.subr.bf16.mxu0 0
    %569 = vmatpush1.bf16.msra.mxu0 0
    %570 = vmatprep.subr.bf16.mxu0 0
    %571 = vmatpush1.bf16.msra.mxu0 0
    %572 = vmatprep.mubr.bf16.mxu0 0
    %573 = vmatmul.mubr.bf16.gmra.mrb[0].mxu0 %v490
    %v574 = vpop.f32.mrb[0].mxu0
    %v575 = vadd.f32 0.0, %v574
    %v576 = vpop.f32.mrb[0].mxu0
    %v577 = vpop.f32.mrb[0].mxu0
    %v578 = vadd.f32 0.0, %v577
    %v579 = vpop.f32.mrb[0].mxu0
    %580 = vdwg.mxu0
    %v582 = vlaneseq
    %v583 = vshrl.u32 %v582, 7
    %v584 = vsub.s32 0, %v583
    %v585 = vrot.slane %v379, %v584
    %v589 = vunpack.c.l.b16 %v359
    %v590 = vunpack.c.l.b16 %v360
    %v591 = vpack.c.b16 %v590, %v589
    %v593 = vsel %vm312, %v591, 0
    %595 = vmatprep.subr.bf16.mxu0 0
    %596 = vmatpush1.bf16.msra.mxu0 %v485
    %597 = vmatprep.subr.bf16.mxu0 0
    %598 = vmatpush1.bf16.msra.mxu0 0
    %599 = vmatprep.subr.bf16.mxu0 0
    %600 = vmatpush1.bf16.msra.mxu0 0
    %601 = vmatprep.subr.bf16.mxu0 0
    %602 = vmatpush1.bf16.msra.mxu0 0
    %603 = vmatprep.subr.bf16.mxu0 0
    %604 = vmatpush1.bf16.msra.mxu0 0
    %605 = vmatprep.subr.bf16.mxu0 0
    %606 = vmatpush1.bf16.msra.mxu0 0
    %607 = vmatprep.subr.bf16.mxu0 0
    %608 = vmatpush1.bf16.msra.mxu0 0
    %609 = vmatprep.subr.bf16.mxu0 0
    %610 = vmatpush1.bf16.msra.mxu0 0
    %611 = vmatprep.subr.bf16.mxu0 0
    %612 = vmatpush1.bf16.msra.mxu0 0
    %613 = vmatprep.subr.bf16.mxu0 0
    %614 = vmatpush1.bf16.msra.mxu0 0
    %615 = vmatprep.subr.bf16.mxu0 0
    %616 = vmatpush1.bf16.msra.mxu0 0
    %617 = vmatprep.subr.bf16.mxu0 0
    %618 = vmatpush1.bf16.msra.mxu0 0
    %619 = vmatprep.subr.bf16.mxu0 0
    %620 = vmatpush1.bf16.msra.mxu0 0
    %621 = vmatprep.subr.bf16.mxu0 0
    %622 = vmatpush1.bf16.msra.mxu0 0
    %623 = vmatprep.subr.bf16.mxu0 0
    %624 = vmatpush1.bf16.msra.mxu0 0
    %625 = vmatprep.subr.bf16.mxu0 0
    %626 = vmatpush1.bf16.msra.mxu0 0
    %627 = vmatprep.mubr.bf16.mxu0 0
    %628 = vmatmul.mubr.bf16.gmra.mrb[0].mxu0 %v593
    %v629 = vpop.f32.mrb[0].mxu0
    %v630 = vadd.f32 %v585, %v629
    %v631 = vpop.f32.mrb[0].mxu0
    %v632 = vpop.f32.mrb[0].mxu0
    %v633 = vadd.f32 %v585, %v632
    %v634 = vpop.f32.mrb[0].mxu0
    %635 = vdwg.mxu0
    %v636 = vadd.f32 %v630, %v575
    %v637 = vadd.f32 %v633, %v578
    %v638 = vld [vmem:[%s2] sm:$0xf]
    %v639 = vld [vmem:[%s2 + $0x4] sm:$0xf]
    %v640 = vld [vmem:[%s11] sm:$0xf]
    %v641 = vld [vmem:[%s11 + $0x4] sm:$0xf]
    %v642 = vld [vmem:[%s11 + $0x8] sm:$0xf]
    %v643 = vld [vmem:[%s11 + $0xc] sm:$0xf]
    %v644 = vld [vmem:[%s11 + $0x10] sm:$0xf]
    %v645 = vld [vmem:[%s11 + $0x14] sm:$0xf]
    %v646 = vld [vmem:[%s11 + $0x18] sm:$0xf]
    %v647 = vld [vmem:[%s11 + $0x1c] sm:$0xf]
    %v648 = vld [vmem:[%s11 + $0x20] sm:$0xf]
    %v649 = vld [vmem:[%s11 + $0x24] sm:$0xf]
    %v650 = vld [vmem:[%s11 + $0x28] sm:$0xf]
    %v651 = vld [vmem:[%s11 + $0x2c] sm:$0xf]
    %v652 = vld [vmem:[%s11 + $0x30] sm:$0xf]
    %v653 = vld [vmem:[%s11 + $0x34] sm:$0xf]
    %v654 = vld [vmem:[%s11 + $0x38] sm:$0xf]
    %v655 = vld [vmem:[%s11 + $0x3c] sm:$0xf]
    %v656 = vld [vmem:[%s12] sm:$0x1]
    %v657 = vld [vmem:[%s13] sm:$0xf]
    %v658 = vld [vmem:[%s13 + $0x4] sm:$0xf]
    %v659 = vld [vmem:[%s13 + $0x8] sm:$0xf]
    %v660 = vld [vmem:[%s13 + $0xc] sm:$0xf]
    %v661 = vld [vmem:[%s13 + $0x10] sm:$0xf]
    %v662 = vld [vmem:[%s13 + $0x14] sm:$0xf]
    %v663 = vld [vmem:[%s13 + $0x18] sm:$0xf]
    %v664 = vld [vmem:[%s13 + $0x1c] sm:$0xf]
    %v665 = vld [vmem:[%s13 + $0x20] sm:$0xf]
    %v666 = vld [vmem:[%s13 + $0x24] sm:$0xf]
    %v667 = vld [vmem:[%s13 + $0x28] sm:$0xf]
    %v668 = vld [vmem:[%s13 + $0x2c] sm:$0xf]
    %v669 = vld [vmem:[%s13 + $0x30] sm:$0xf]
    %v670 = vld [vmem:[%s13 + $0x34] sm:$0xf]
    %v671 = vld [vmem:[%s13 + $0x38] sm:$0xf]
    %v672 = vld [vmem:[%s13 + $0x3c] sm:$0xf]
    %v689 = vunpack.c.l.b16 %v640
    %v690 = vunpack.c.l.b16 %v641
    %v691 = vunpack.c.l.b16 %v642
    %v692 = vunpack.c.l.b16 %v643
    %v693 = vunpack.c.l.b16 %v644
    %v694 = vunpack.c.l.b16 %v645
    %v695 = vunpack.c.l.b16 %v646
    %v696 = vunpack.c.l.b16 %v647
    %v697 = vunpack.c.l.b16 %v648
    %v698 = vunpack.c.l.b16 %v649
    %v699 = vunpack.c.l.b16 %v650
    %v700 = vunpack.c.l.b16 %v651
    %v701 = vunpack.c.l.b16 %v652
    %v702 = vunpack.c.l.b16 %v653
    %v703 = vunpack.c.l.b16 %v654
    %v704 = vunpack.c.l.b16 %v655
    %v705 = vpack.c.b16 %v690, %v689
    %v706 = vpack.c.b16 %v692, %v691
    %v707 = vpack.c.b16 %v694, %v693
    %v708 = vpack.c.b16 %v696, %v695
    %v709 = vpack.c.b16 %v698, %v697
    %v710 = vpack.c.b16 %v700, %v699
    %v711 = vpack.c.b16 %v702, %v701
    %v712 = vpack.c.b16 %v704, %v703
    %721 = vmatprep.subr.bf16.mxu0 0
    %722 = vmatpush1.bf16.msra.mxu0 %v705
    %723 = vmatprep.subr.bf16.mxu0 0
    %724 = vmatpush1.bf16.msra.mxu0 %v706
    %725 = vmatprep.subr.bf16.mxu0 0
    %726 = vmatpush1.bf16.msra.mxu0 %v707
    %727 = vmatprep.subr.bf16.mxu0 0
    %728 = vmatpush1.bf16.msra.mxu0 %v708
    %729 = vmatprep.subr.bf16.mxu0 0
    %730 = vmatpush1.bf16.msra.mxu0 %v709
    %731 = vmatprep.subr.bf16.mxu0 0
    %732 = vmatpush1.bf16.msra.mxu0 %v710
    %733 = vmatprep.subr.bf16.mxu0 0
    %734 = vmatpush1.bf16.msra.mxu0 %v711
    %735 = vmatprep.subr.bf16.mxu0 0
    %736 = vmatpush1.bf16.msra.mxu0 %v712
    %737 = vmatprep.subr.bf16.mxu0 0
    %738 = vmatpush1.bf16.msra.mxu0 0
    %739 = vmatprep.subr.bf16.mxu0 0
    %740 = vmatpush1.bf16.msra.mxu0 0
    %741 = vmatprep.subr.bf16.mxu0 0
    %742 = vmatpush1.bf16.msra.mxu0 0
    %743 = vmatprep.subr.bf16.mxu0 0
    %744 = vmatpush1.bf16.msra.mxu0 0
    %745 = vmatprep.subr.bf16.mxu0 0
    %746 = vmatpush1.bf16.msra.mxu0 0
    %747 = vmatprep.subr.bf16.mxu0 0
    %748 = vmatpush1.bf16.msra.mxu0 0
    %749 = vmatprep.subr.bf16.mxu0 0
    %750 = vmatpush1.bf16.msra.mxu0 0
    %751 = vmatprep.subr.bf16.mxu0 0
    %752 = vmatpush1.bf16.msra.mxu0 0
    %753 = vmatprep.mubr.bf16.mxu0 0
    %754 = vmatmul.mubr.bf16.gmra.mrb[0].mxu0 %v490
    %v755 = vpop.f32.mrb[0].mxu0
    %v756 = vadd.f32 0.0, %v755
    %v757 = vpop.f32.mrb[0].mxu0
    %v758 = vpop.f32.mrb[0].mxu0
    %v759 = vadd.f32 0.0, %v758
    %v760 = vpop.f32.mrb[0].mxu0
    %761 = vdwg.mxu0
    %v762 = vpack.c.bf16 %v759, %v756
    %v779 = vunpack.c.l.b16 %v657
    %v780 = vunpack.c.l.b16 %v658
    %v781 = vunpack.c.l.b16 %v659
    %v782 = vunpack.c.l.b16 %v660
    %v783 = vunpack.c.l.b16 %v661
    %v784 = vunpack.c.l.b16 %v662
    %v785 = vunpack.c.l.b16 %v663
    %v786 = vunpack.c.l.b16 %v664
    %v787 = vunpack.c.l.b16 %v665
    %v788 = vunpack.c.l.b16 %v666
    %v789 = vunpack.c.l.b16 %v667
    %v790 = vunpack.c.l.b16 %v668
    %v791 = vunpack.c.l.b16 %v669
    %v792 = vunpack.c.l.b16 %v670
    %v793 = vunpack.c.l.b16 %v671
    %v794 = vunpack.c.l.b16 %v672
    %v795 = vpack.c.b16 %v780, %v779
    %v796 = vpack.c.b16 %v782, %v781
    %v797 = vpack.c.b16 %v784, %v783
    %v798 = vpack.c.b16 %v786, %v785
    %v799 = vpack.c.b16 %v788, %v787
    %v800 = vpack.c.b16 %v790, %v789
    %v801 = vpack.c.b16 %v792, %v791
    %v802 = vpack.c.b16 %v794, %v793
    %811 = vmatprep.subr.bf16.mxu0 0
    %812 = vmatpush1.bf16.msra.mxu0 %v795
    %813 = vmatprep.subr.bf16.mxu0 0
    %814 = vmatpush1.bf16.msra.mxu0 %v796
    %815 = vmatprep.subr.bf16.mxu0 0
    %816 = vmatpush1.bf16.msra.mxu0 %v797
    %817 = vmatprep.subr.bf16.mxu0 0
    %818 = vmatpush1.bf16.msra.mxu0 %v798
    %819 = vmatprep.subr.bf16.mxu0 0
    %820 = vmatpush1.bf16.msra.mxu0 %v799
    %821 = vmatprep.subr.bf16.mxu0 0
    %822 = vmatpush1.bf16.msra.mxu0 %v800
    %823 = vmatprep.subr.bf16.mxu0 0
    %824 = vmatpush1.bf16.msra.mxu0 %v801
    %825 = vmatprep.subr.bf16.mxu0 0
    %826 = vmatpush1.bf16.msra.mxu0 %v802
    %827 = vmatprep.subr.bf16.mxu0 0
    %828 = vmatpush1.bf16.msra.mxu0 0
    %829 = vmatprep.subr.bf16.mxu0 0
    %830 = vmatpush1.bf16.msra.mxu0 0
    %831 = vmatprep.subr.bf16.mxu0 0
    %832 = vmatpush1.bf16.msra.mxu0 0
    %833 = vmatprep.subr.bf16.mxu0 0
    %834 = vmatpush1.bf16.msra.mxu0 0
    %835 = vmatprep.subr.bf16.mxu0 0
    %836 = vmatpush1.bf16.msra.mxu0 0
    %837 = vmatprep.subr.bf16.mxu0 0
    %838 = vmatpush1.bf16.msra.mxu0 0
    %839 = vmatprep.subr.bf16.mxu0 0
    %840 = vmatpush1.bf16.msra.mxu0 0
    %841 = vmatprep.subr.bf16.mxu0 0
    %842 = vmatpush1.bf16.msra.mxu0 0
    %843 = vmatprep.mubr.bf16.mxu0 0
    %844 = vmatmul.mubr.bf16.gmra.mrb[0].mxu0 %v120
    %v845 = vpop.f32.mrb[0].mxu0
    %v846 = vadd.f32 0.0, %v845
    %v847 = vpop.f32.mrb[0].mxu0
    %v848 = vpop.f32.mrb[0].mxu0
    %v849 = vadd.f32 0.0, %v848
    %v850 = vpop.f32.mrb[0].mxu0
    %851 = vdwg.mxu0
    %v853 = vlaneseq
    %v854 = vshrl.u32 %v853, 7
    %v855 = vsub.s32 0, %v854
    %v856 = vrot.slane %v656, %v855
    %v860 = vunpack.c.l.b16 %v638
    %v861 = vunpack.c.l.b16 %v639
    %v862 = vpack.c.b16 %v861, %v860
    %v864 = vsel %vm312, %v862, 0
    %866 = vmatprep.subr.bf16.mxu0 0
    %867 = vmatpush1.bf16.msra.mxu0 %v762
    %868 = vmatprep.subr.bf16.mxu0 0
    %869 = vmatpush1.bf16.msra.mxu0 0
    %870 = vmatprep.subr.bf16.mxu0 0
    %871 = vmatpush1.bf16.msra.mxu0 0
    %872 = vmatprep.subr.bf16.mxu0 0
    %873 = vmatpush1.bf16.msra.mxu0 0
    %874 = vmatprep.subr.bf16.mxu0 0
    %875 = vmatpush1.bf16.msra.mxu0 0
    %876 = vmatprep.subr.bf16.mxu0 0
    %877 = vmatpush1.bf16.msra.mxu0 0
    %878 = vmatprep.subr.bf16.mxu0 0
    %879 = vmatpush1.bf16.msra.mxu0 0
    %880 = vmatprep.subr.bf16.mxu0 0
    %881 = vmatpush1.bf16.msra.mxu0 0
    %882 = vmatprep.subr.bf16.mxu0 0
    %883 = vmatpush1.bf16.msra.mxu0 0
    %884 = vmatprep.subr.bf16.mxu0 0
    %885 = vmatpush1.bf16.msra.mxu0 0
    %886 = vmatprep.subr.bf16.mxu0 0
    %887 = vmatpush1.bf16.msra.mxu0 0
    %888 = vmatprep.subr.bf16.mxu0 0
    %889 = vmatpush1.bf16.msra.mxu0 0
    %890 = vmatprep.subr.bf16.mxu0 0
    %891 = vmatpush1.bf16.msra.mxu0 0
    %892 = vmatprep.subr.bf16.mxu0 0
    %893 = vmatpush1.bf16.msra.mxu0 0
    %894 = vmatprep.subr.bf16.mxu0 0
    %895 = vmatpush1.bf16.msra.mxu0 0
    %896 = vmatprep.subr.bf16.mxu0 0
    %897 = vmatpush1.bf16.msra.mxu0 0
    %898 = vmatprep.mubr.bf16.mxu0 0
    %899 = vmatmul.mubr.bf16.gmra.mrb[0].mxu0 %v864
    %v900 = vpop.f32.mrb[0].mxu0
    %v901 = vadd.f32 %v856, %v900
    %v902 = vpop.f32.mrb[0].mxu0
    %v903 = vpop.f32.mrb[0].mxu0
    %v904 = vadd.f32 %v856, %v903
    %v905 = vpop.f32.mrb[0].mxu0
    %906 = vdwg.mxu0
    %v907 = vadd.f32 %v901, %v846
    %v908 = vadd.f32 %v904, %v849
    %v909 = vadd.f32 %v357, %v907
    %v910 = vadd.f32 %v358, %v908
    %v911 = vmax.f32 %v909, 0.0
    %v912 = vmax.f32 %v910, 0.0
    %v913 = vmax.f32 %v636, 0.0
    %v914 = vmax.f32 %v637, 0.0
    %v915 = vpack.c.bf16 %v912, %v911
    %v916 = vld [vmem:[%s14] sm:$0xf]
    %v917 = vld [vmem:[%s14 + $0x4] sm:$0xf]
    %v918 = vld [vmem:[%s14 + $0x8] sm:$0xf]
    %v919 = vld [vmem:[%s14 + $0xc] sm:$0xf]
    %v920 = vld [vmem:[%s15] sm:$0x1]
    %v921 = vld [vmem:[%s16] sm:$0xf]
    %v922 = vld [vmem:[%s16 + $0x4] sm:$0xf]
    %v923 = vld [vmem:[%s16 + $0x8] sm:$0xf]
    %v924 = vld [vmem:[%s16 + $0xc] sm:$0xf]
    %v929 = vunpack.c.l.b16 %v916
    %v930 = vunpack.c.l.b16 %v917
    %v931 = vunpack.c.l.b16 %v918
    %v932 = vunpack.c.l.b16 %v919
    %v933 = vpack.c.b16 %v930, %v929
    %v934 = vpack.c.b16 %v932, %v931
    %vm937 = vcmask 261120
    %v939 = vsel %vm937, %v915, 0
    %941 = vmatprep.subr.bf16.mxu0 0
    %942 = vmatpush1.bf16.msra.mxu0 %v933
    %943 = vmatprep.subr.bf16.mxu0 0
    %944 = vmatpush1.bf16.msra.mxu0 %v934
    %945 = vmatprep.subr.bf16.mxu0 0
    %946 = vmatpush1.bf16.msra.mxu0 0
    %947 = vmatprep.subr.bf16.mxu0 0
    %948 = vmatpush1.bf16.msra.mxu0 0
    %949 = vmatprep.subr.bf16.mxu0 0
    %950 = vmatpush1.bf16.msra.mxu0 0
    %951 = vmatprep.subr.bf16.mxu0 0
    %952 = vmatpush1.bf16.msra.mxu0 0
    %953 = vmatprep.subr.bf16.mxu0 0
    %954 = vmatpush1.bf16.msra.mxu0 0
    %955 = vmatprep.subr.bf16.mxu0 0
    %956 = vmatpush1.bf16.msra.mxu0 0
    %957 = vmatprep.subr.bf16.mxu0 0
    %958 = vmatpush1.bf16.msra.mxu0 0
    %959 = vmatprep.subr.bf16.mxu0 0
    %960 = vmatpush1.bf16.msra.mxu0 0
    %961 = vmatprep.subr.bf16.mxu0 0
    %962 = vmatpush1.bf16.msra.mxu0 0
    %963 = vmatprep.subr.bf16.mxu0 0
    %964 = vmatpush1.bf16.msra.mxu0 0
    %965 = vmatprep.subr.bf16.mxu0 0
    %966 = vmatpush1.bf16.msra.mxu0 0
    %967 = vmatprep.subr.bf16.mxu0 0
    %968 = vmatpush1.bf16.msra.mxu0 0
    %969 = vmatprep.subr.bf16.mxu0 0
    %970 = vmatpush1.bf16.msra.mxu0 0
    %971 = vmatprep.subr.bf16.mxu0 0
    %972 = vmatpush1.bf16.msra.mxu0 0
    %973 = vmatprep.mubr.bf16.mxu0 0
    %974 = vmatmul.mubr.bf16.gmra.mrb[0].mxu0 %v939
    %v975 = vpop.f32.mrb[0].mxu0
    %v976 = vadd.f32 0.0, %v975
    %v977 = vpop.f32.mrb[0].mxu0
    %v978 = vpop.f32.mrb[0].mxu0
    %v979 = vadd.f32 0.0, %v978
    %v980 = vpop.f32.mrb[0].mxu0
    %981 = vdwg.mxu0
    %v982 = vpack.c.bf16 %v979, %v976
    %v987 = vunpack.c.l.b16 %v921
    %v988 = vunpack.c.l.b16 %v922
    %v989 = vunpack.c.l.b16 %v923
    %v990 = vunpack.c.l.b16 %v924
    %v991 = vpack.c.b16 %v988, %v987
    %v992 = vpack.c.b16 %v990, %v989
    %995 = vmatprep.subr.bf16.mxu0 0
    %996 = vmatpush1.bf16.msra.mxu0 %v991
    %997 = vmatprep.subr.bf16.mxu0 0
    %998 = vmatpush1.bf16.msra.mxu0 %v992
    %999 = vmatprep.subr.bf16.mxu0 0
    %1000 = vmatpush1.bf16.msra.mxu0 0
    %1001 = vmatprep.subr.bf16.mxu0 0
    %1002 = vmatpush1.bf16.msra.mxu0 0
    %1003 = vmatprep.subr.bf16.mxu0 0
    %1004 = vmatpush1.bf16.msra.mxu0 0
    %1005 = vmatprep.subr.bf16.mxu0 0
    %1006 = vmatpush1.bf16.msra.mxu0 0
    %1007 = vmatprep.subr.bf16.mxu0 0
    %1008 = vmatpush1.bf16.msra.mxu0 0
    %1009 = vmatprep.subr.bf16.mxu0 0
    %1010 = vmatpush1.bf16.msra.mxu0 0
    %1011 = vmatprep.subr.bf16.mxu0 0
    %1012 = vmatpush1.bf16.msra.mxu0 0
    %1013 = vmatprep.subr.bf16.mxu0 0
    %1014 = vmatpush1.bf16.msra.mxu0 0
    %1015 = vmatprep.subr.bf16.mxu0 0
    %1016 = vmatpush1.bf16.msra.mxu0 0
    %1017 = vmatprep.subr.bf16.mxu0 0
    %1018 = vmatpush1.bf16.msra.mxu0 0
    %1019 = vmatprep.subr.bf16.mxu0 0
    %1020 = vmatpush1.bf16.msra.mxu0 0
    %1021 = vmatprep.subr.bf16.mxu0 0
    %1022 = vmatpush1.bf16.msra.mxu0 0
    %1023 = vmatprep.subr.bf16.mxu0 0
    %1024 = vmatpush1.bf16.msra.mxu0 0
    %1025 = vmatprep.subr.bf16.mxu0 0
    %1026 = vmatpush1.bf16.msra.mxu0 0
    %1027 = vmatprep.mubr.bf16.mxu0 0
    %1028 = vmatmul.mubr.bf16.gmra.mrb[0].mxu0 %v939
    %v1029 = vpop.f32.mrb[0].mxu0
    %v1030 = vadd.f32 0.0, %v1029
    %v1031 = vpop.f32.mrb[0].mxu0
    %v1032 = vpop.f32.mrb[0].mxu0
    %v1033 = vadd.f32 0.0, %v1032
    %v1034 = vpop.f32.mrb[0].mxu0
    %1035 = vdwg.mxu0
    %v1037 = vlaneseq
    %v1038 = vshrl.u32 %v1037, 7
    %v1039 = vsub.s32 0, %v1038
    %v1040 = vrot.slane %v920, %v1039
    %1042 = vmatprep.subr.bf16.mxu0 0
    %1043 = vmatpush1.bf16.msra.mxu0 %v982
    %1044 = vmatprep.subr.bf16.mxu0 0
    %1045 = vmatpush1.bf16.msra.mxu0 0
    %1046 = vmatprep.subr.bf16.mxu0 0
    %1047 = vmatpush1.bf16.msra.mxu0 0
    %1048 = vmatprep.subr.bf16.mxu0 0
    %1049 = vmatpush1.bf16.msra.mxu0 0
    %1050 = vmatprep.subr.bf16.mxu0 0
    %1051 = vmatpush1.bf16.msra.mxu0 0
    %1052 = vmatprep.subr.bf16.mxu0 0
    %1053 = vmatpush1.bf16.msra.mxu0 0
    %1054 = vmatprep.subr.bf16.mxu0 0
    %1055 = vmatpush1.bf16.msra.mxu0 0
    %1056 = vmatprep.subr.bf16.mxu0 0
    %1057 = vmatpush1.bf16.msra.mxu0 0
    %1058 = vmatprep.subr.bf16.mxu0 0
    %1059 = vmatpush1.bf16.msra.mxu0 0
    %1060 = vmatprep.subr.bf16.mxu0 0
    %1061 = vmatpush1.bf16.msra.mxu0 0
    %1062 = vmatprep.subr.bf16.mxu0 0
    %1063 = vmatpush1.bf16.msra.mxu0 0
    %1064 = vmatprep.subr.bf16.mxu0 0
    %1065 = vmatpush1.bf16.msra.mxu0 0
    %1066 = vmatprep.subr.bf16.mxu0 0
    %1067 = vmatpush1.bf16.msra.mxu0 0
    %1068 = vmatprep.subr.bf16.mxu0 0
    %1069 = vmatpush1.bf16.msra.mxu0 0
    %1070 = vmatprep.subr.bf16.mxu0 0
    %1071 = vmatpush1.bf16.msra.mxu0 0
    %1072 = vmatprep.subr.bf16.mxu0 0
    %1073 = vmatpush1.bf16.msra.mxu0 0
    %1074 = vmatprep.mubr.bf16.mxu0 0
    %1075 = vmatmul.mubr.bf16.gmra.mrb[0].mxu0 %v314
    %v1076 = vpop.f32.mrb[0].mxu0
    %v1077 = vadd.f32 %v1040, %v1076
    %v1078 = vpop.f32.mrb[0].mxu0
    %v1079 = vpop.f32.mrb[0].mxu0
    %v1080 = vadd.f32 %v1040, %v1079
    %v1081 = vpop.f32.mrb[0].mxu0
    %1082 = vdwg.mxu0
    %v1083 = vadd.f32 %v1077, %v1030
    %v1084 = vadd.f32 %v1080, %v1033
    %v1085 = vpack.c.bf16 %v914, %v913
    %v1086 = vld [vmem:[%s20] sm:$0xf]
    %v1087 = vld [vmem:[%s20 + $0x4] sm:$0xf]
    %v1088 = vld [vmem:[%s20 + $0x8] sm:$0xf]
    %v1089 = vld [vmem:[%s20 + $0xc] sm:$0xf]
    %v1090 = vld [vmem:[%s21] sm:$0x1]
    %v1091 = vld [vmem:[%s22] sm:$0xf]
    %v1092 = vld [vmem:[%s22 + $0x4] sm:$0xf]
    %v1093 = vld [vmem:[%s22 + $0x8] sm:$0xf]
    %v1094 = vld [vmem:[%s22 + $0xc] sm:$0xf]
    %v1099 = vunpack.c.l.b16 %v1086
    %v1100 = vunpack.c.l.b16 %v1087
    %v1101 = vunpack.c.l.b16 %v1088
    %v1102 = vunpack.c.l.b16 %v1089
    %v1103 = vpack.c.b16 %v1100, %v1099
    %v1104 = vpack.c.b16 %v1102, %v1101
    %v1108 = vsel %vm937, %v1085, 0
    %1110 = vmatprep.subr.bf16.mxu0 0
    %1111 = vmatpush1.bf16.msra.mxu0 %v1103
    %1112 = vmatprep.subr.bf16.mxu0 0
    %1113 = vmatpush1.bf16.msra.mxu0 %v1104
    %1114 = vmatprep.subr.bf16.mxu0 0
    %1115 = vmatpush1.bf16.msra.mxu0 0
    %1116 = vmatprep.subr.bf16.mxu0 0
    %1117 = vmatpush1.bf16.msra.mxu0 0
    %1118 = vmatprep.subr.bf16.mxu0 0
    %1119 = vmatpush1.bf16.msra.mxu0 0
    %1120 = vmatprep.subr.bf16.mxu0 0
    %1121 = vmatpush1.bf16.msra.mxu0 0
    %1122 = vmatprep.subr.bf16.mxu0 0
    %1123 = vmatpush1.bf16.msra.mxu0 0
    %1124 = vmatprep.subr.bf16.mxu0 0
    %1125 = vmatpush1.bf16.msra.mxu0 0
    %1126 = vmatprep.subr.bf16.mxu0 0
    %1127 = vmatpush1.bf16.msra.mxu0 0
    %1128 = vmatprep.subr.bf16.mxu0 0
    %1129 = vmatpush1.bf16.msra.mxu0 0
    %1130 = vmatprep.subr.bf16.mxu0 0
    %1131 = vmatpush1.bf16.msra.mxu0 0
    %1132 = vmatprep.subr.bf16.mxu0 0
    %1133 = vmatpush1.bf16.msra.mxu0 0
    %1134 = vmatprep.subr.bf16.mxu0 0
    %1135 = vmatpush1.bf16.msra.mxu0 0
    %1136 = vmatprep.subr.bf16.mxu0 0
    %1137 = vmatpush1.bf16.msra.mxu0 0
    %1138 = vmatprep.subr.bf16.mxu0 0
    %1139 = vmatpush1.bf16.msra.mxu0 0
    %1140 = vmatprep.subr.bf16.mxu0 0
    %1141 = vmatpush1.bf16.msra.mxu0 0
    %1142 = vmatprep.mubr.bf16.mxu0 0
    %1143 = vmatmul.mubr.bf16.gmra.mrb[0].mxu0 %v1108
    %v1144 = vpop.f32.mrb[0].mxu0
    %v1145 = vadd.f32 0.0, %v1144
    %v1146 = vpop.f32.mrb[0].mxu0
    %v1147 = vpop.f32.mrb[0].mxu0
    %v1148 = vadd.f32 0.0, %v1147
    %v1149 = vpop.f32.mrb[0].mxu0
    %1150 = vdwg.mxu0
    %v1151 = vpack.c.bf16 %v1148, %v1145
    %v1156 = vunpack.c.l.b16 %v1091
    %v1157 = vunpack.c.l.b16 %v1092
    %v1158 = vunpack.c.l.b16 %v1093
    %v1159 = vunpack.c.l.b16 %v1094
    %v1160 = vpack.c.b16 %v1157, %v1156
    %v1161 = vpack.c.b16 %v1159, %v1158
    %1164 = vmatprep.subr.bf16.mxu0 0
    %1165 = vmatpush1.bf16.msra.mxu0 %v1160
    %1166 = vmatprep.subr.bf16.mxu0 0
    %1167 = vmatpush1.bf16.msra.mxu0 %v1161
    %1168 = vmatprep.subr.bf16.mxu0 0
    %1169 = vmatpush1.bf16.msra.mxu0 0
    %1170 = vmatprep.subr.bf16.mxu0 0
    %1171 = vmatpush1.bf16.msra.mxu0 0
    %1172 = vmatprep.subr.bf16.mxu0 0
    %1173 = vmatpush1.bf16.msra.mxu0 0
    %1174 = vmatprep.subr.bf16.mxu0 0
    %1175 = vmatpush1.bf16.msra.mxu0 0
    %1176 = vmatprep.subr.bf16.mxu0 0
    %1177 = vmatpush1.bf16.msra.mxu0 0
    %1178 = vmatprep.subr.bf16.mxu0 0
    %1179 = vmatpush1.bf16.msra.mxu0 0
    %1180 = vmatprep.subr.bf16.mxu0 0
    %1181 = vmatpush1.bf16.msra.mxu0 0
    %1182 = vmatprep.subr.bf16.mxu0 0
    %1183 = vmatpush1.bf16.msra.mxu0 0
    %1184 = vmatprep.subr.bf16.mxu0 0
    %1185 = vmatpush1.bf16.msra.mxu0 0
    %1186 = vmatprep.subr.bf16.mxu0 0
    %1187 = vmatpush1.bf16.msra.mxu0 0
    %1188 = vmatprep.subr.bf16.mxu0 0
    %1189 = vmatpush1.bf16.msra.mxu0 0
    %1190 = vmatprep.subr.bf16.mxu0 0
    %1191 = vmatpush1.bf16.msra.mxu0 0
    %1192 = vmatprep.subr.bf16.mxu0 0
    %1193 = vmatpush1.bf16.msra.mxu0 0
    %1194 = vmatprep.subr.bf16.mxu0 0
    %1195 = vmatpush1.bf16.msra.mxu0 0
    %1196 = vmatprep.mubr.bf16.mxu0 0
    %1197 = vmatmul.mubr.bf16.gmra.mrb[0].mxu0 %v939
    %v1198 = vpop.f32.mrb[0].mxu0
    %v1199 = vadd.f32 0.0, %v1198
    %v1200 = vpop.f32.mrb[0].mxu0
    %v1201 = vpop.f32.mrb[0].mxu0
    %v1202 = vadd.f32 0.0, %v1201
    %v1203 = vpop.f32.mrb[0].mxu0
    %1204 = vdwg.mxu0
    %v1206 = vlaneseq
    %v1207 = vshrl.u32 %v1206, 7
    %v1208 = vsub.s32 0, %v1207
    %v1209 = vrot.slane %v1090, %v1208
    %1211 = vmatprep.subr.bf16.mxu0 0
    %1212 = vmatpush1.bf16.msra.mxu0 %v1151
    %1213 = vmatprep.subr.bf16.mxu0 0
    %1214 = vmatpush1.bf16.msra.mxu0 0
    %1215 = vmatprep.subr.bf16.mxu0 0
    %1216 = vmatpush1.bf16.msra.mxu0 0
    %1217 = vmatprep.subr.bf16.mxu0 0
    %1218 = vmatpush1.bf16.msra.mxu0 0
    %1219 = vmatprep.subr.bf16.mxu0 0
    %1220 = vmatpush1.bf16.msra.mxu0 0
    %1221 = vmatprep.subr.bf16.mxu0 0
    %1222 = vmatpush1.bf16.msra.mxu0 0
    %1223 = vmatprep.subr.bf16.mxu0 0
    %1224 = vmatpush1.bf16.msra.mxu0 0
    %1225 = vmatprep.subr.bf16.mxu0 0
    %1226 = vmatpush1.bf16.msra.mxu0 0
    %1227 = vmatprep.subr.bf16.mxu0 0
    %1228 = vmatpush1.bf16.msra.mxu0 0
    %1229 = vmatprep.subr.bf16.mxu0 0
    %1230 = vmatpush1.bf16.msra.mxu0 0
    %1231 = vmatprep.subr.bf16.mxu0 0
    %1232 = vmatpush1.bf16.msra.mxu0 0
    %1233 = vmatprep.subr.bf16.mxu0 0
    %1234 = vmatpush1.bf16.msra.mxu0 0
    %1235 = vmatprep.subr.bf16.mxu0 0
    %1236 = vmatpush1.bf16.msra.mxu0 0
    %1237 = vmatprep.subr.bf16.mxu0 0
    %1238 = vmatpush1.bf16.msra.mxu0 0
    %1239 = vmatprep.subr.bf16.mxu0 0
    %1240 = vmatpush1.bf16.msra.mxu0 0
    %1241 = vmatprep.subr.bf16.mxu0 0
    %1242 = vmatpush1.bf16.msra.mxu0 0
    %1243 = vmatprep.mubr.bf16.mxu0 0
    %1244 = vmatmul.mubr.bf16.gmra.mrb[0].mxu0 %v864
    %v1245 = vpop.f32.mrb[0].mxu0
    %v1246 = vadd.f32 %v1209, %v1245
    %v1247 = vpop.f32.mrb[0].mxu0
    %v1248 = vpop.f32.mrb[0].mxu0
    %v1249 = vadd.f32 %v1209, %v1248
    %v1250 = vpop.f32.mrb[0].mxu0
    %1251 = vdwg.mxu0
    %v1252 = vadd.f32 %v1246, %v1199
    %v1253 = vadd.f32 %v1249, %v1202
    %v1254 = vadd.f32 %v1083, %v1252
    %v1255 = vadd.f32 %v1084, %v1253
    %v1256 = vld [vmem:[%s23] sm:$0xff]
    %v1257 = vld [vmem:[%s23 + $0x8] sm:$0xff]
    %vm1258 = vcmask 31744
    %v1259 = vsel %vm1258, %v1254, -inf
    %1260 = vmax.xlane.f32.xlu0 %v1259
    %v1261 = vpop.xlane.xlu0 %1260
    %v1262 = vsel %vm1258, %v1255, -inf
    %1263 = vmax.xlane.f32.xlu0 %v1262
    %v1264 = vpop.xlane.xlu0 %1263
    %v1265 = vsub.f32 %v1254, %v1261
    %v1266 = vsub.f32 %v1255, %v1264
    %v1267 = vmul.f32 %v1265, 1.442695
    %v1268 = vpow.pop %v1267
    %v1269 = vmul.f32 %v1266, 1.442695
    %v1270 = vpow.pop %v1269
    %v1271 = vsel %vm1258, %v1268, 0.0
    %1272 = vadd.xlane.f32.xlu0 %v1271
    %v1273 = vpop.xlane.xlu0 %1272
    %v1274 = vsel %vm1258, %v1270, 0.0
    %1275 = vadd.xlane.f32.xlu0 %v1274
    %v1276 = vpop.xlane.xlu0 %1275
    %v1277 = vlog2.pop %v1273
    %v1278 = vmul.f32 %v1277, 0.6931472
    %v1279 = vlog2.pop %v1276
    %v1280 = vmul.f32 %v1279, 0.6931472
    %v1281 = vadd.f32 %v1278, %v1261
    %v1282 = vadd.f32 %v1280, %v1264
    %v1283 = vlaneseq
    %v1284 = vand.u32 %v1283, 127
    %1285 = vset.pattern.permute.xlu0 0
    %1286 = vperm.xlu0 %1285, %v1256
    %v1287 = vpop.permute.xlu0 %1286
    %1288 = vset.pattern.permute.xlu0 0
    %1289 = vperm.xlu0 %1288, %v1257
    %v1290 = vpop.permute.xlu0 %1289
    %vm1291 = vcmp.eq.s32.totalorder %v1284, %v1287
    %vm1292 = vcmp.eq.s32.totalorder %v1284, %v1290
    %v1293 = vsel %vm1291, %v1254, 0.0
    %v1294 = vsel %vm1292, %v1255, 0.0
    %v1295 = vsel %vm1258, %v1293, 0.0
    %1296 = vadd.xlane.f32.xlu0 %v1295
    %v1297 = vpop.xlane.xlu0 %1296
    %v1298 = vsel %vm1258, %v1294, 0.0
    %1299 = vadd.xlane.f32.xlu0 %v1298
    %v1300 = vpop.xlane.xlu0 %1299
    %vm1301 = vcmp.ge.s32.totalorder %v1256, 0
    %vm1302 = vcmp.ge.s32.totalorder %v1257, 0
    %v1303 = vsel %vm1301, 1, 0
    %v1304 = vsel %vm1302, 1, 0
    %v1305 = vcvt.s32.f32 %v1303
    %v1306 = vcvt.s32.f32 %v1304
    %v1307 = vsub.f32 %v1281, %v1297
    %v1308 = vsub.f32 %v1282, %v1300
    %v1309 = vmul.f32 %v1307, %v1305
    %v1310 = vmul.f32 %v1308, %v1306
    %vm1311 = vcmask 7168
    %v1312 = vsel %vm1311, %v1309, 0.0
    %v1313 = vsel %vm1311, %v1310, 0.0
    %v1314 = vadd.f32 %v1312, %v1313
    %v1315 = vrot.slane %v1314, 4
    %v1316 = vadd.f32 %v1314, %v1315
    %v1317 = vrot.slane %v1316, 2
    %v1318 = vadd.f32 %v1316, %v1317
    %v1319 = vrot.slane %v1318, 1
    %v1320 = vadd.f32 %v1318, %v1319
    %v1321 = vrcp.pop 16.0
    %v1322 = vmul.f32 %v1320, %v1321
    %vm1323 = vcmask 0
    %1324 = vst.msk [vmem:[#allocation2] sm:$0x1] %vm1323, %v1322
    // Predicated region
    $region98: #{tpu_custom_call.1} parent=1 // pred_check
      _
    $region99: #{tpu_custom_call.1} parent=1 // pred_check_branch
      %1326 = sbr.rel (0) target = $region101
    $region100: #{tpu_custom_call.1} parent=1 // pred_region
      %s1328 = ssub.s32 16, 16
      %1329 = vsyncadd [#allocation3], %s1328
      %s1331 = sshll.u32 [#allocation2], 4
      %s1332 = int_to_ptr.vmem [resolvable:$true] %s1331
      %1334 = dma.vmem_to_hbm [thread:$0]  %s1332, 16, %s24, [#allocation3]
    $region101: #{tpu_custom_call.1} parent=1 // pred_fallthru
      _
    // Predicated region
    $region102: #{tpu_custom_call.1} parent=1 // pred_check
      _
    $region103: #{tpu_custom_call.1} parent=1 // pred_check_branch
      %1336 = sbr.rel (0) target = $region105
    $region104: #{tpu_custom_call.1} parent=1 // pred_region
      %1337 = dma.done [#allocation3], 16
    $region105: #{tpu_custom_call.1} parent=1 // pred_fallthru
      _
    %1338 = vsyncpa [#allocation3], 1

</llo_original>
